<compile_context>
chip_gen: v6e
topology: v6e:2x2x1
jax: 0.10.0
libtpu: 0.0.40
codegen_flags: <defaults>
</compile_context>

<pallas_src>
import jax
import jax.numpy as jnp
from jax.experimental import pallas as pl
from jax.experimental.pallas import tpu as pltpu


def _projector_kernel(tx_ref, tw_ref, tb_ref, ix_ref, iw_ref, ib_ref,
                      to_ref, io_ref):
    """Fused: text_out = tx @ tw_t + tb ; image_out = ix @ iw_t + ib.

    Weights arrive in bf16; activations are cast to bf16 on-chip. Matmuls
    accumulate in f32 and the bias add is in f32 (nn.Linear semantics up to
    bf16 weight/activation rounding).
    """
    tx = tx_ref[...].astype(jnp.bfloat16)
    ix = ix_ref[...].astype(jnp.bfloat16)
    to_ref[...] = (
        jnp.dot(tx, tw_ref[...], preferred_element_type=jnp.float32)
        + tb_ref[...]
    ).astype(to_ref.dtype)
    io_ref[...] = (
        jnp.dot(ix, iw_ref[...], preferred_element_type=jnp.float32)
        + ib_ref[...]
    ).astype(io_ref.dtype)


def _const_spec(shape, single_buffer):
    """Spec for a grid-invariant (resident) block; single-buffer it when the
    grid has more than one step (its index_map is (0, 0) every step)."""
    if single_buffer and hasattr(pl, "Buffered"):
        return pl.BlockSpec(shape, lambda i: (0, 0),
                            pipeline_mode=pl.Buffered(1))
    return pl.BlockSpec(shape, lambda i: (0, 0))


@jax.jit
def cross_modal_projector_pallas(text_feat, image_feat,
                                 text_w_t, text_b2,
                                 image_w_t, image_b2):
    """Fused forward of CrossModalProjector.

    text_feat:  [M, Kt] f32    text_w_t:  [Kt, N] bf16   text_b2:  [1, N] f32
    image_feat: [M, Ki] f32    image_w_t: [Ki, N] bf16   image_b2: [1, N] f32
    returns (text_out [M, N] f32, image_out [M, N] f32)
    """
    M, Kt = text_feat.shape
    Mi, Ki = image_feat.shape
    assert M == Mi, "text and image batch must match"
    N = text_w_t.shape[1]
    assert text_w_t.shape == (Kt, N)
    assert image_w_t.shape == (Ki, N)
    assert text_b2.shape == (1, N) and image_b2.shape == (1, N)

    # Fixed batch-tile cap: keeps double-buffered activation/output VMEM bounded
    # on every chip generation (v7x: 64 MiB physical; v5e: 16 MiB default scoped)
    # and gives a real multi-step "parallel" axis for large batches.
    TM_CAP = 256
    tm = M if M <= TM_CAP else TM_CAP          # tm == M (full dim) or tm % 8 == 0
    n_m = pl.cdiv(M, tm)                       # ragged last block handled by Pallas
    single_buffer_consts = n_m > 1

    w_bytes = (Kt + Ki) * N * text_w_t.dtype.itemsize
    act_bytes = M * Kt * text_feat.dtype.itemsize + M * Ki * image_feat.dtype.itemsize
    out_bytes = 2 * M * N * 4
    bias_bytes = 2 * N * 4
    cost = pl.CostEstimate(
        flops=2 * M * (Kt + Ki) * N,
        transcendentals=0,
        bytes_accessed=w_bytes + act_bytes + out_bytes + bias_bytes,
    )

    in_specs = [
        pl.BlockSpec((tm, Kt), lambda i: (i, 0)),            # text activations
        _const_spec((Kt, N), single_buffer_consts),          # text weight (resident)
        _const_spec((1, N), single_buffer_consts),           # text bias
        pl.BlockSpec((tm, Ki), lambda i: (i, 0)),            # image activations
        _const_spec((Ki, N), single_buffer_consts),          # image weight (resident)
        _const_spec((1, N), single_buffer_consts),           # image bias
    ]
    out_specs = (
        pl.BlockSpec((tm, N), lambda i: (i, 0)),              # lane-dense (N=256)
        pl.BlockSpec((tm, N), lambda i: (i, 0)),
    )

    return pl.pallas_call(
        _projector_kernel,
        out_shape=(
            jax.ShapeDtypeStruct((M, N), jnp.float32),
            jax.ShapeDtypeStruct((M, N), jnp.float32),
        ),
        grid=(n_m,),
        in_specs=in_specs,
        out_specs=out_specs,
        compiler_params=pltpu.CompilerParams(
            dimension_semantics=("parallel",),
        ),
        cost_estimate=cost,
    )(text_feat, text_w_t, text_b2, image_feat, image_w_t, image_b2)


class CrossModalProjectorPallas:
    """Pallas equivalent of the PyTorch CrossModalProjector module."""

    def __init__(self, text_dim=768, image_dim=2048, hidden_dim=256, key=None):
        if key is None:
            key = jax.random.PRNGKey(0)
        k1, k2, k3, k4 = jax.random.split(key, 4)
        # nn.Linear-style init: U(-1/sqrt(in), 1/sqrt(in)).
        tb = 1.0 / float(text_dim) ** 0.5
        ib = 1.0 / float(image_dim) ** 0.5
        # f32 master weights (kept only for reference checks), stored
        # PRE-TRANSPOSED as [in_features, out_features].
        self._text_w_f32 = jax.random.uniform(
            k1, (text_dim, hidden_dim), jnp.float32, -tb, tb)
        self._image_w_f32 = jax.random.uniform(
            k3, (image_dim, hidden_dim), jnp.float32, -ib, ib)
        self.text_b = jax.random.uniform(
            k2, (hidden_dim,), jnp.float32, -tb, tb)
        self.image_b = jax.random.uniform(
            k4, (hidden_dim,), jnp.float32, -ib, ib)
        # Streamed kernel weights in bf16 (cast once, not per call).
        self.text_w_t = self._text_w_f32.astype(jnp.bfloat16)
        self.image_w_t = self._image_w_f32.astype(jnp.bfloat16)
        # 2-D f32 bias views prepared once at init.
        self._text_b2 = self.text_b.reshape(1, hidden_dim)
        self._image_b2 = self.image_b.reshape(1, hidden_dim)

    def __call__(self, text_feat, image_feat):
        return cross_modal_projector_pallas(
            text_feat, image_feat,
            self.text_w_t, self._text_b2,
            self.image_w_t, self._image_b2,
        )


if __name__ == "__main__":
    # Small shapes consistent with the module defaults (Linear on last dim).
    batch = 8
    text_dim, image_dim, hidden_dim = 768, 2048, 256

    key = jax.random.PRNGKey(0)
    k_txt, k_img, k_params = jax.random.split(key, 3)
    text_feat = jax.random.normal(k_txt, (batch, text_dim), jnp.float32)
    image_feat = jax.random.normal(k_img, (batch, image_dim), jnp.float32)

    model = CrossModalProjectorPallas(text_dim, image_dim, hidden_dim,
                                      key=k_params)
    text_out, image_out = model(text_feat, image_feat)
    jax.block_until_ready((text_out, image_out))

    assert text_out.shape == (batch, hidden_dim)
    assert image_out.shape == (batch, hidden_dim)

    # Tight check against a bf16-weight reference (same dtypes as the kernel,
    # f32 accumulation) — verifies the Pallas kernel itself.
    ref_text_bf16 = jnp.dot(text_feat.astype(jnp.bfloat16), model.text_w_t,
                            preferred_element_type=jnp.float32) + model.text_b
    ref_image_bf16 = jnp.dot(image_feat.astype(jnp.bfloat16), model.image_w_t,
                             preferred_element_type=jnp.float32) + model.image_b
    assert jnp.allclose(text_out, ref_text_bf16, atol=1e-3, rtol=1e-3)
    assert jnp.allclose(image_out, ref_image_bf16, atol=1e-3, rtol=1e-3)

    # Loose check against the full-f32 nn.Linear reference (bf16 weight
    # quantization error only).
    ref_text_f32 = text_feat @ model._text_w_f32 + model.text_b
    ref_image_f32 = image_feat @ model._image_w_f32 + model.image_b
    assert jnp.allclose(text_out, ref_text_f32, atol=5e-2, rtol=5e-2)
    assert jnp.allclose(image_out, ref_image_f32, atol=5e-2, rtol=5e-2)

    print("KERNEL_OK")
</pallas_src>

<mosaic_0001>
module attributes {stable_mosaic.version = 11 : i64} {
  func.func @_projector_kernel(%arg0: i32, %arg1: memref<8x768xf32, #tpu.memory_space<vmem>>, %arg2: memref<768x256xbf16, #tpu.memory_space<vmem>>, %arg3: memref<1x256xf32, #tpu.memory_space<vmem>>, %arg4: memref<8x2048xf32, #tpu.memory_space<vmem>>, %arg5: memref<2048x256xbf16, #tpu.memory_space<vmem>>, %arg6: memref<1x256xf32, #tpu.memory_space<vmem>>, %arg7: memref<8x256xf32, #tpu.memory_space<vmem>>, %arg8: memref<8x256xf32, #tpu.memory_space<vmem>>) attributes {dimension_semantics = [#tpu.dimension_semantics<parallel>], iteration_bounds = array<i64: 1>, scalar_prefetch = 0 : i64, scratch_operands = 0 : i64, tpu.core_type = #tpu.core_type<tc>, window_params = [{transform_indices = @transform_0, window_bounds = array<i64: 8, 768>}, {pipeline_mode = #tpu.pipeline_mode<synchronous>, transform_indices = @transform_1, window_bounds = array<i64: 768, 256>}, {pipeline_mode = #tpu.pipeline_mode<synchronous>, transform_indices = @transform_2, window_bounds = array<i64: 1, 256>}, {transform_indices = @transform_3, window_bounds = array<i64: 8, 2048>}, {pipeline_mode = #tpu.pipeline_mode<synchronous>, transform_indices = @transform_4, window_bounds = array<i64: 2048, 256>}, {pipeline_mode = #tpu.pipeline_mode<synchronous>, transform_indices = @transform_5, window_bounds = array<i64: 1, 256>}, {transform_indices = @transform_6, window_bounds = array<i64: 8, 256>}, {transform_indices = @transform_7, window_bounds = array<i64: 8, 256>}]} {
    %c0 = arith.constant 0 : index
    %c0_0 = arith.constant 0 : index
    %0 = vector.load %arg1[%c0, %c0_0] : memref<8x768xf32, #tpu.memory_space<vmem>>, vector<8x768xf32>
    %1 = arith.truncf %0 : vector<8x768xf32> to vector<8x768xbf16>
    %c0_1 = arith.constant 0 : index
    %c0_2 = arith.constant 0 : index
    %2 = vector.load %arg4[%c0_1, %c0_2] : memref<8x2048xf32, #tpu.memory_space<vmem>>, vector<8x2048xf32>
    %3 = arith.truncf %2 : vector<8x2048xf32> to vector<8x2048xbf16>
    %c0_3 = arith.constant 0 : index
    %c0_4 = arith.constant 0 : index
    %4 = vector.load %arg2[%c0_3, %c0_4] : memref<768x256xbf16, #tpu.memory_space<vmem>>, vector<768x256xbf16>
    %cst = arith.constant dense<0.000000e+00> : vector<8x256xf32>
    %5 = tpu.matmul %1, %4, %cst {dimension_numbers = #tpu.dot_dimension_numbers<[1], [0], [0], [1], [0, 0, 1, 1], [], []>} : vector<8x768xbf16>, vector<768x256xbf16>, vector<8x256xf32> -> vector<8x256xf32>
    %c0_5 = arith.constant 0 : index
    %c0_6 = arith.constant 0 : index
    %6 = vector.load %arg3[%c0_5, %c0_6] : memref<1x256xf32, #tpu.memory_space<vmem>>, vector<1x256xf32>
    %7 = vector.broadcast %6 : vector<1x256xf32> to vector<8x256xf32>
    %8 = arith.addf %5, %7 : vector<8x256xf32>
    %c0_7 = arith.constant 0 : index
    %c0_8 = arith.constant 0 : index
    %9 = vector.load %arg7[%c0_7, %c0_8] : memref<8x256xf32, #tpu.memory_space<vmem>>, vector<8x256xf32>
    tpu.vector_store %arg7[%c0_7, %c0_8], %8 {strides = array<i32>} : memref<8x256xf32, #tpu.memory_space<vmem>>, vector<8x256xf32>,
    %c0_9 = arith.constant 0 : index
    %c0_10 = arith.constant 0 : index
    %10 = vector.load %arg5[%c0_9, %c0_10] : memref<2048x256xbf16, #tpu.memory_space<vmem>>, vector<2048x256xbf16>
    %cst_11 = arith.constant dense<0.000000e+00> : vector<8x256xf32>
    %11 = tpu.matmul %3, %10, %cst_11 {dimension_numbers = #tpu.dot_dimension_numbers<[1], [0], [0], [1], [0, 0, 1, 1], [], []>} : vector<8x2048xbf16>, vector<2048x256xbf16>, vector<8x256xf32> -> vector<8x256xf32>
    %c0_12 = arith.constant 0 : index
    %c0_13 = arith.constant 0 : index
    %12 = vector.load %arg6[%c0_12, %c0_13] : memref<1x256xf32, #tpu.memory_space<vmem>>, vector<1x256xf32>
    %13 = vector.broadcast %12 : vector<1x256xf32> to vector<8x256xf32>
    %14 = arith.addf %11, %13 : vector<8x256xf32>
    %c0_14 = arith.constant 0 : index
    %c0_15 = arith.constant 0 : index
    %15 = vector.load %arg8[%c0_14, %c0_15] : memref<8x256xf32, #tpu.memory_space<vmem>>, vector<8x256xf32>
    tpu.vector_store %arg8[%c0_14, %c0_15], %14 {strides = array<i32>} : memref<8x256xf32, #tpu.memory_space<vmem>>, vector<8x256xf32>,
    return
  }
  func.func @transform_0(%arg0: i32) -> (i32, i32) {
    %c0_i32 = arith.constant 0 : i32
    %c0_i32_0 = arith.constant 0 : i32
    return %arg0, %c0_i32 : i32, i32
  }
  func.func @transform_1(%arg0: i32) -> (i32, i32) {
    %c0_i32 = arith.constant 0 : i32
    %c0_i32_0 = arith.constant 0 : i32
    %c0_i32_1 = arith.constant 0 : i32
    return %c0_i32, %c0_i32_0 : i32, i32
  }
  func.func @transform_2(%arg0: i32) -> (i32, i32) {
    %c0_i32 = arith.constant 0 : i32
    %c0_i32_0 = arith.constant 0 : i32
    %c0_i32_1 = arith.constant 0 : i32
    return %c0_i32, %c0_i32_0 : i32, i32
  }
  func.func @transform_3(%arg0: i32) -> (i32, i32) {
    %c0_i32 = arith.constant 0 : i32
    %c0_i32_0 = arith.constant 0 : i32
    return %arg0, %c0_i32 : i32, i32
  }
  func.func @transform_4(%arg0: i32) -> (i32, i32) {
    %c0_i32 = arith.constant 0 : i32
    %c0_i32_0 = arith.constant 0 : i32
    %c0_i32_1 = arith.constant 0 : i32
    return %c0_i32, %c0_i32_0 : i32, i32
  }
  func.func @transform_5(%arg0: i32) -> (i32, i32) {
    %c0_i32 = arith.constant 0 : i32
    %c0_i32_0 = arith.constant 0 : i32
    %c0_i32_1 = arith.constant 0 : i32
    return %c0_i32, %c0_i32_0 : i32, i32
  }
  func.func @transform_6(%arg0: i32) -> (i32, i32) {
    %c0_i32 = arith.constant 0 : i32
    %c0_i32_0 = arith.constant 0 : i32
    return %arg0, %c0_i32 : i32, i32
  }
  func.func @transform_7(%arg0: i32) -> (i32, i32) {
    %c0_i32 = arith.constant 0 : i32
    %c0_i32_0 = arith.constant 0 : i32
    return %arg0, %c0_i32 : i32, i32
  }
}

</mosaic_0001>

<llo_original>
// kernel: cross_modal_projector_pallas.1
$region0: #{cross_modal_projector_pallas.1}
  #allocation0 [shape = 'u32[]', space=smem, size = 0x4, offset = 0x4, fixed_abs, tag = 'smem constant byte address 0x4 - core index']
  #allocation1 [shape = 'u32[144,128]{1,0:T(1,128)}', space=vmem, size = 0x12000, scoped, tag = 'internal scratch']
  %s0 = inlined_call_operand.hbm [shape: f32[8,768], index: 0, kind: input, shape index: {}]
  %s1 = inlined_call_operand.hbm [shape: bf16[768,256], index: 1, kind: input, shape index: {}]
  %s2 = inlined_call_operand.vmem [shape: f32[1,256], index: 2, kind: input, shape index: {}]
  %s3 = inlined_call_operand.hbm [shape: f32[8,2048], index: 3, kind: input, shape index: {}]
  %s4 = inlined_call_operand.hbm [shape: bf16[2048,256], index: 4, kind: input, shape index: {}]
  %s5 = inlined_call_operand.vmem [shape: f32[1,256], index: 5, kind: input, shape index: {}]
  %s6 = inlined_call_operand.hbm [shape: f32[8,256], index: 6, kind: output, shape index: {0}]
  %s7 = inlined_call_operand.hbm [shape: f32[8,256], index: 7, kind: output, shape index: {1}]
  %8 = xla_tuple %s6, %s7
  %s9 = sld [smem:[#allocation0]]
  $region58: #{cross_modal_projector_pallas.1} parent=0
    _
  %s11 = ssub.s32 1, %s9
  %s12 = scalar_select 0, %s11, %s9
  $region1: #{cross_modal_projector_pallas.1} parent=0
    #allocation2 [shape = 'u8[24576]{0}', space=vmem, size = 0x6000, scoped, tag = 'input window, operand 0, single buffered']
    #allocation3 [shape = 's32[1]{0}', space=sflag, size = 0x4, scoped, tag = 'scoped memory for cross_modal_projector_pallas.1']
    #allocation4 [shape = 's32[1]{0}', space=sflag, size = 0x4, scoped, tag = 'scoped memory for cross_modal_projector_pallas.1']
    #allocation5 [shape = 'u8[393216]{0}', space=vmem, size = 0x60000, scoped, tag = 'input window, operand 1, single buffered']
    #allocation6 [shape = 's32[1]{0}', space=sflag, size = 0x4, scoped, tag = 'scoped memory for cross_modal_projector_pallas.1']
    #allocation7 [shape = 'u8[65536]{0}', space=vmem, size = 0x10000, scoped, tag = 'input window, operand 3, single buffered']
    #allocation8 [shape = 'u8[1048576]{0}', space=vmem, size = 0x100000, scoped, tag = 'input window, operand 4, single buffered']
    #allocation9 [shape = 's32[1]{0}', space=sflag, size = 0x4, scoped, tag = 'scoped memory for cross_modal_projector_pallas.1']
    #allocation10 [shape = 'u8[8192]{0}', space=vmem, size = 0x2000, scoped, tag = 'output window, operand 0, single buffered']
    #allocation11 [shape = 'u8[8192]{0}', space=vmem, size = 0x2000, scoped, tag = 'output window, operand 1, single buffered']
    #allocation12 [shape = 's32[1]{0}', space=sflag, size = 0x4, scoped, tag = 'scoped memory for cross_modal_projector_pallas.1']
    %13 = vsyncpa [#allocation3], 0
    %14 = vsyncpa [#allocation6], 0
    %15 = vsyncpa [#allocation9], 0
    %16 = vsyncpa [#allocation4], 0
    %17 = vsyncpa [#allocation12], 0
    // Predicated region
    $region2: #{cross_modal_projector_pallas.1} parent=1 // pred_check
      _
    $region3: #{cross_modal_projector_pallas.1} parent=1 // pred_check_branch
      %19 = sbr.rel (0) target = $region5
    $region4: #{cross_modal_projector_pallas.1} parent=1 // pred_region
      %s21 = ssub.s32 768, 768
      %22 = vsyncadd [#allocation3], %s21
      %s24 = sshll.u32 [#allocation2], 4
      %s25 = int_to_ptr.vmem [resolvable:$true] %s24
      %27 = dma.hbm_to_vmem [thread:$0]  %s0, 768, %s25, [#allocation3]
    $region5: #{cross_modal_projector_pallas.1} parent=1 // pred_fallthru
      _
    // Predicated region
    $region6: #{cross_modal_projector_pallas.1} parent=1 // pred_check
      _
    $region7: #{cross_modal_projector_pallas.1} parent=1 // pred_check_branch
      %29 = sbr.rel (0) target = $region9
    $region8: #{cross_modal_projector_pallas.1} parent=1 // pred_region
      %s31 = ssub.s32 12288, 12288
      %32 = vsyncadd [#allocation6], %s31
      %s33 = sshll.u32 [#allocation5], 4
      %s34 = int_to_ptr.vmem [resolvable:$true] %s33
      %39 = dma.hbm_to_vmem [thread:$0]  %s1, 12288, %s34, [#allocation6], 128, 128, 8
    $region9: #{cross_modal_projector_pallas.1} parent=1 // pred_fallthru
      _
    // Predicated region
    $region10: #{cross_modal_projector_pallas.1} parent=1 // pred_check
      _
    $region11: #{cross_modal_projector_pallas.1} parent=1 // pred_check_branch
      %41 = sbr.rel (0) target = $region13
    $region12: #{cross_modal_projector_pallas.1} parent=1 // pred_region
      _
    $region13: #{cross_modal_projector_pallas.1} parent=1 // pred_fallthru
      _
    // Predicated region
    $region14: #{cross_modal_projector_pallas.1} parent=1 // pred_check
      _
    $region15: #{cross_modal_projector_pallas.1} parent=1 // pred_check_branch
      %43 = sbr.rel (0) target = $region17
    $region16: #{cross_modal_projector_pallas.1} parent=1 // pred_region
      %s45 = ssub.s32 2048, 2048
      %46 = vsyncadd [#allocation6], %s45
      %s48 = sshll.u32 [#allocation7], 4
      %s49 = int_to_ptr.vmem [resolvable:$true] %s48
      %51 = dma.hbm_to_vmem [thread:$0]  %s3, 2048, %s49, [#allocation6]
    $region17: #{cross_modal_projector_pallas.1} parent=1 // pred_fallthru
      _
    // Predicated region
    $region18: #{cross_modal_projector_pallas.1} parent=1 // pred_check
      _
    $region19: #{cross_modal_projector_pallas.1} parent=1 // pred_check_branch
      %53 = sbr.rel (0) target = $region21
    $region20: #{cross_modal_projector_pallas.1} parent=1 // pred_region
      %s55 = ssub.s32 32768, 32768
      %56 = vsyncadd [#allocation9], %s55
      %s57 = sshll.u32 [#allocation8], 4
      %s58 = int_to_ptr.vmem [resolvable:$true] %s57
      %63 = dma.hbm_to_vmem [thread:$0]  %s4, 32768, %s58, [#allocation9], 128, 128, 8
    $region21: #{cross_modal_projector_pallas.1} parent=1 // pred_fallthru
      _
    // Predicated region
    $region22: #{cross_modal_projector_pallas.1} parent=1 // pred_check
      _
    $region23: #{cross_modal_projector_pallas.1} parent=1 // pred_check_branch
      %65 = sbr.rel (0) target = $region25
    $region24: #{cross_modal_projector_pallas.1} parent=1 // pred_region
      _
    $region25: #{cross_modal_projector_pallas.1} parent=1 // pred_fallthru
      _
    // Predicated region
    $region26: #{cross_modal_projector_pallas.1} parent=1 // pred_check
      _
    $region27: #{cross_modal_projector_pallas.1} parent=1 // pred_check_branch
      %67 = sbr.rel (0) target = $region29
    $region28: #{cross_modal_projector_pallas.1} parent=1 // pred_region
      %68 = dma.done [#allocation3], 768
    $region29: #{cross_modal_projector_pallas.1} parent=1 // pred_fallthru
      _
    // Predicated region
    $region30: #{cross_modal_projector_pallas.1} parent=1 // pred_check
      _
    $region31: #{cross_modal_projector_pallas.1} parent=1 // pred_check_branch
      %70 = sbr.rel (0) target = $region33
    $region32: #{cross_modal_projector_pallas.1} parent=1 // pred_region
      %71 = dma.done [#allocation6], 12288
    $region33: #{cross_modal_projector_pallas.1} parent=1 // pred_fallthru
      _
    // Predicated region
    $region34: #{cross_modal_projector_pallas.1} parent=1 // pred_check
      _
    $region35: #{cross_modal_projector_pallas.1} parent=1 // pred_check_branch
      %73 = sbr.rel (0) target = $region37
    $region36: #{cross_modal_projector_pallas.1} parent=1 // pred_region
      %74 = dma.done [#allocation6], 2048
    $region37: #{cross_modal_projector_pallas.1} parent=1 // pred_fallthru
      _
    // Predicated region
    $region38: #{cross_modal_projector_pallas.1} parent=1 // pred_check
      _
    $region39: #{cross_modal_projector_pallas.1} parent=1 // pred_check_branch
      %76 = sbr.rel (0) target = $region41
    $region40: #{cross_modal_projector_pallas.1} parent=1 // pred_region
      %77 = dma.done [#allocation9], 32768
    $region41: #{cross_modal_projector_pallas.1} parent=1 // pred_fallthru
      _
    %v78 = vld [vmem:[#allocation2] sm:$0xff]
    %v79 = vld [vmem:[#allocation2 + $0x8] sm:$0xff]
    %v80 = vld [vmem:[#allocation2 + $0x10] sm:$0xff]
    %v81 = vld [vmem:[#allocation2 + $0x18] sm:$0xff]
    %v82 = vld [vmem:[#allocation2 + $0x20] sm:$0xff]
    %v83 = vld [vmem:[#allocation2 + $0x28] sm:$0xff]
    %v84 = vpack.c.bf16 %v78, %v78
    %v85 = vpack.c.bf16 %v79, %v79
    %v86 = vpack.c.bf16 %v80, %v80
    %v87 = vpack.c.bf16 %v81, %v81
    %v88 = vpack.c.bf16 %v82, %v82
    %v89 = vpack.c.bf16 %v83, %v83
    %v90 = vld [vmem:[#allocation7] sm:$0xff]
    %v91 = vld [vmem:[#allocation7 + $0x8] sm:$0xff]
    %v92 = vld [vmem:[#allocation7 + $0x10] sm:$0xff]
    %v93 = vld [vmem:[#allocation7 + $0x18] sm:$0xff]
    %v94 = vld [vmem:[#allocation7 + $0x20] sm:$0xff]
    %v95 = vld [vmem:[#allocation7 + $0x28] sm:$0xff]
    %v96 = vld [vmem:[#allocation7 + $0x30] sm:$0xff]
    %v97 = vld [vmem:[#allocation7 + $0x38] sm:$0xff]
    %v98 = vld [vmem:[#allocation7 + $0x40] sm:$0xff]
    %v99 = vld [vmem:[#allocation7 + $0x48] sm:$0xff]
    %v100 = vld [vmem:[#allocation7 + $0x50] sm:$0xff]
    %v101 = vld [vmem:[#allocation7 + $0x58] sm:$0xff]
    %v102 = vld [vmem:[#allocation7 + $0x60] sm:$0xff]
    %v103 = vld [vmem:[#allocation7 + $0x68] sm:$0xff]
    %v104 = vld [vmem:[#allocation7 + $0x70] sm:$0xff]
    %v105 = vld [vmem:[#allocation7 + $0x78] sm:$0xff]
    %v106 = vpack.c.bf16 %v90, %v90
    %v107 = vpack.c.bf16 %v91, %v91
    %v108 = vpack.c.bf16 %v92, %v92
    %v109 = vpack.c.bf16 %v93, %v93
    %v110 = vpack.c.bf16 %v94, %v94
    %v111 = vpack.c.bf16 %v95, %v95
    %v112 = vpack.c.bf16 %v96, %v96
    %v113 = vpack.c.bf16 %v97, %v97
    %v114 = vpack.c.bf16 %v98, %v98
    %v115 = vpack.c.bf16 %v99, %v99
    %v116 = vpack.c.bf16 %v100, %v100
    %v117 = vpack.c.bf16 %v101, %v101
    %v118 = vpack.c.bf16 %v102, %v102
    %v119 = vpack.c.bf16 %v103, %v103
    %v120 = vpack.c.bf16 %v104, %v104
    %v121 = vpack.c.bf16 %v105, %v105
    %v122 = vld [vmem:[#allocation5] sm:$0xff]
    %v123 = vld [vmem:[#allocation5 + $0x8] sm:$0xff]
    %v124 = vld [vmem:[#allocation5 + $0x10] sm:$0xff]
    %v125 = vld [vmem:[#allocation5 + $0x18] sm:$0xff]
    %v126 = vld [vmem:[#allocation5 + $0x20] sm:$0xff]
    %v127 = vld [vmem:[#allocation5 + $0x28] sm:$0xff]
    %v128 = vld [vmem:[#allocation5 + $0x30] sm:$0xff]
    %v129 = vld [vmem:[#allocation5 + $0x38] sm:$0xff]
    %v130 = vld [vmem:[#allocation5 + $0x40] sm:$0xff]
    %v131 = vld [vmem:[#allocation5 + $0x48] sm:$0xff]
    %v132 = vld [vmem:[#allocation5 + $0x50] sm:$0xff]
    %v133 = vld [vmem:[#allocation5 + $0x58] sm:$0xff]
    %v134 = vld [vmem:[#allocation5 + $0x60] sm:$0xff]
    %v135 = vld [vmem:[#allocation5 + $0x68] sm:$0xff]
    %v136 = vld [vmem:[#allocation5 + $0x70] sm:$0xff]
    %v137 = vld [vmem:[#allocation5 + $0x78] sm:$0xff]
    %v138 = vld [vmem:[#allocation5 + $0x80] sm:$0xff]
    %v139 = vld [vmem:[#allocation5 + $0x88] sm:$0xff]
    %v140 = vld [vmem:[#allocation5 + $0x90] sm:$0xff]
    %v141 = vld [vmem:[#allocation5 + $0x98] sm:$0xff]
    %v142 = vld [vmem:[#allocation5 + $0xa0] sm:$0xff]
    %v143 = vld [vmem:[#allocation5 + $0xa8] sm:$0xff]
    %v144 = vld [vmem:[#allocation5 + $0xb0] sm:$0xff]
    %v145 = vld [vmem:[#allocation5 + $0xb8] sm:$0xff]
    %v146 = vld [vmem:[#allocation5 + $0xc0] sm:$0xff]
    %v147 = vld [vmem:[#allocation5 + $0xc8] sm:$0xff]
    %v148 = vld [vmem:[#allocation5 + $0xd0] sm:$0xff]
    %v149 = vld [vmem:[#allocation5 + $0xd8] sm:$0xff]
    %v150 = vld [vmem:[#allocation5 + $0xe0] sm:$0xff]
    %v151 = vld [vmem:[#allocation5 + $0xe8] sm:$0xff]
    %v152 = vld [vmem:[#allocation5 + $0xf0] sm:$0xff]
    %v153 = vld [vmem:[#allocation5 + $0xf8] sm:$0xff]
    %v154 = vld [vmem:[#allocation5 + $0x100] sm:$0xff]
    %v155 = vld [vmem:[#allocation5 + $0x108] sm:$0xff]
    %v156 = vld [vmem:[#allocation5 + $0x110] sm:$0xff]
    %v157 = vld [vmem:[#allocation5 + $0x118] sm:$0xff]
    %v158 = vld [vmem:[#allocation5 + $0x120] sm:$0xff]
    %v159 = vld [vmem:[#allocation5 + $0x128] sm:$0xff]
    %v160 = vld [vmem:[#allocation5 + $0x130] sm:$0xff]
    %v161 = vld [vmem:[#allocation5 + $0x138] sm:$0xff]
    %v162 = vld [vmem:[#allocation5 + $0x140] sm:$0xff]
    %v163 = vld [vmem:[#allocation5 + $0x148] sm:$0xff]
    %v164 = vld [vmem:[#allocation5 + $0x150] sm:$0xff]
    %v165 = vld [vmem:[#allocation5 + $0x158] sm:$0xff]
    %v166 = vld [vmem:[#allocation5 + $0x160] sm:$0xff]
    %v167 = vld [vmem:[#allocation5 + $0x168] sm:$0xff]
    %v168 = vld [vmem:[#allocation5 + $0x170] sm:$0xff]
    %v169 = vld [vmem:[#allocation5 + $0x178] sm:$0xff]
    %v170 = vld [vmem:[#allocation5 + $0x180] sm:$0xff]
    %v171 = vld [vmem:[#allocation5 + $0x188] sm:$0xff]
    %v172 = vld [vmem:[#allocation5 + $0x190] sm:$0xff]
    %v173 = vld [vmem:[#allocation5 + $0x198] sm:$0xff]
    %v174 = vld [vmem:[#allocation5 + $0x1a0] sm:$0xff]
    %v175 = vld [vmem:[#allocation5 + $0x1a8] sm:$0xff]
    %v176 = vld [vmem:[#allocation5 + $0x1b0] sm:$0xff]
    %v177 = vld [vmem:[#allocation5 + $0x1b8] sm:$0xff]
    %v178 = vld [vmem:[#allocation5 + $0x1c0] sm:$0xff]
    %v179 = vld [vmem:[#allocation5 + $0x1c8] sm:$0xff]
    %v180 = vld [vmem:[#allocation5 + $0x1d0] sm:$0xff]
    %v181 = vld [vmem:[#allocation5 + $0x1d8] sm:$0xff]
    %v182 = vld [vmem:[#allocation5 + $0x1e0] sm:$0xff]
    %v183 = vld [vmem:[#allocation5 + $0x1e8] sm:$0xff]
    %v184 = vld [vmem:[#allocation5 + $0x1f0] sm:$0xff]
    %v185 = vld [vmem:[#allocation5 + $0x1f8] sm:$0xff]
    %v186 = vld [vmem:[#allocation5 + $0x200] sm:$0xff]
    %v187 = vld [vmem:[#allocation5 + $0x208] sm:$0xff]
    %v188 = vld [vmem:[#allocation5 + $0x210] sm:$0xff]
    %v189 = vld [vmem:[#allocation5 + $0x218] sm:$0xff]
    %v190 = vld [vmem:[#allocation5 + $0x220] sm:$0xff]
    %v191 = vld [vmem:[#allocation5 + $0x228] sm:$0xff]
    %v192 = vld [vmem:[#allocation5 + $0x230] sm:$0xff]
    %v193 = vld [vmem:[#allocation5 + $0x238] sm:$0xff]
    %v194 = vld [vmem:[#allocation5 + $0x240] sm:$0xff]
    %v195 = vld [vmem:[#allocation5 + $0x248] sm:$0xff]
    %v196 = vld [vmem:[#allocation5 + $0x250] sm:$0xff]
    %v197 = vld [vmem:[#allocation5 + $0x258] sm:$0xff]
    %v198 = vld [vmem:[#allocation5 + $0x260] sm:$0xff]
    %v199 = vld [vmem:[#allocation5 + $0x268] sm:$0xff]
    %v200 = vld [vmem:[#allocation5 + $0x270] sm:$0xff]
    %v201 = vld [vmem:[#allocation5 + $0x278] sm:$0xff]
    %v202 = vld [vmem:[#allocation5 + $0x280] sm:$0xff]
    %v203 = vld [vmem:[#allocation5 + $0x288] sm:$0xff]
    %v204 = vld [vmem:[#allocation5 + $0x290] sm:$0xff]
    %v205 = vld [vmem:[#allocation5 + $0x298] sm:$0xff]
    %v206 = vld [vmem:[#allocation5 + $0x2a0] sm:$0xff]
    %v207 = vld [vmem:[#allocation5 + $0x2a8] sm:$0xff]
    %v208 = vld [vmem:[#allocation5 + $0x2b0] sm:$0xff]
    %v209 = vld [vmem:[#allocation5 + $0x2b8] sm:$0xff]
    %v210 = vld [vmem:[#allocation5 + $0x2c0] sm:$0xff]
    %v211 = vld [vmem:[#allocation5 + $0x2c8] sm:$0xff]
    %v212 = vld [vmem:[#allocation5 + $0x2d0] sm:$0xff]
    %v213 = vld [vmem:[#allocation5 + $0x2d8] sm:$0xff]
    %v214 = vld [vmem:[#allocation5 + $0x2e0] sm:$0xff]
    %v215 = vld [vmem:[#allocation5 + $0x2e8] sm:$0xff]
    %v216 = vld [vmem:[#allocation5 + $0x2f0] sm:$0xff]
    %v217 = vld [vmem:[#allocation5 + $0x2f8] sm:$0xff]
    %v218 = vld [vmem:[%s2] sm:$0x3]
    %v220 = vlaneseq
    %v221 = vshrl.u32 %v220, 7
    %v222 = vsub.s32 0, %v221
    %v223 = vrot.slane %v218, %v222
    %v224 = vlaneseq
    %v225 = vshrl.u32 %v224, 7
    %v226 = vsub.s32 1, %v225
    %v227 = vrot.slane %v218, %v226
    %v326 = vunpack.c.l.b16 %v122
    %v327 = vunpack.c.h.b16 %v122
    %v328 = vunpack.c.l.b16 %v123
    %v329 = vunpack.c.h.b16 %v123
    %v330 = vunpack.c.l.b16 %v124
    %v331 = vunpack.c.h.b16 %v124
    %v332 = vunpack.c.l.b16 %v125
    %v333 = vunpack.c.h.b16 %v125
    %v334 = vunpack.c.l.b16 %v126
    %v335 = vunpack.c.h.b16 %v126
    %v336 = vunpack.c.l.b16 %v127
    %v337 = vunpack.c.h.b16 %v127
    %v338 = vunpack.c.l.b16 %v128
    %v339 = vunpack.c.h.b16 %v128
    %v340 = vunpack.c.l.b16 %v129
    %v341 = vunpack.c.h.b16 %v129
    %v342 = vunpack.c.l.b16 %v130
    %v343 = vunpack.c.h.b16 %v130
    %v344 = vunpack.c.l.b16 %v131
    %v345 = vunpack.c.h.b16 %v131
    %v346 = vunpack.c.l.b16 %v132
    %v347 = vunpack.c.h.b16 %v132
    %v348 = vunpack.c.l.b16 %v133
    %v349 = vunpack.c.h.b16 %v133
    %v350 = vunpack.c.l.b16 %v134
    %v351 = vunpack.c.h.b16 %v134
    %v352 = vunpack.c.l.b16 %v135
    %v353 = vunpack.c.h.b16 %v135
    %v354 = vunpack.c.l.b16 %v136
    %v355 = vunpack.c.h.b16 %v136
    %v356 = vunpack.c.l.b16 %v137
    %v357 = vunpack.c.h.b16 %v137
    %v358 = vunpack.c.l.b16 %v138
    %v359 = vunpack.c.h.b16 %v138
    %v360 = vunpack.c.l.b16 %v139
    %v361 = vunpack.c.h.b16 %v139
    %v362 = vunpack.c.l.b16 %v140
    %v363 = vunpack.c.h.b16 %v140
    %v364 = vunpack.c.l.b16 %v141
    %v365 = vunpack.c.h.b16 %v141
    %v366 = vunpack.c.l.b16 %v142
    %v367 = vunpack.c.h.b16 %v142
    %v368 = vunpack.c.l.b16 %v143
    %v369 = vunpack.c.h.b16 %v143
    %v370 = vunpack.c.l.b16 %v144
    %v371 = vunpack.c.h.b16 %v144
    %v372 = vunpack.c.l.b16 %v145
    %v373 = vunpack.c.h.b16 %v145
    %v374 = vunpack.c.l.b16 %v146
    %v375 = vunpack.c.h.b16 %v146
    %v376 = vunpack.c.l.b16 %v147
    %v377 = vunpack.c.h.b16 %v147
    %v378 = vunpack.c.l.b16 %v148
    %v379 = vunpack.c.h.b16 %v148
    %v380 = vunpack.c.l.b16 %v149
    %v381 = vunpack.c.h.b16 %v149
    %v382 = vunpack.c.l.b16 %v150
    %v383 = vunpack.c.h.b16 %v150
    %v384 = vunpack.c.l.b16 %v151
    %v385 = vunpack.c.h.b16 %v151
    %v386 = vunpack.c.l.b16 %v152
    %v387 = vunpack.c.h.b16 %v152
    %v388 = vunpack.c.l.b16 %v153
    %v389 = vunpack.c.h.b16 %v153
    %v390 = vunpack.c.l.b16 %v154
    %v391 = vunpack.c.h.b16 %v154
    %v392 = vunpack.c.l.b16 %v155
    %v393 = vunpack.c.h.b16 %v155
    %v394 = vunpack.c.l.b16 %v156
    %v395 = vunpack.c.h.b16 %v156
    %v396 = vunpack.c.l.b16 %v157
    %v397 = vunpack.c.h.b16 %v157
    %v398 = vunpack.c.l.b16 %v158
    %v399 = vunpack.c.h.b16 %v158
    %v400 = vunpack.c.l.b16 %v159
    %v401 = vunpack.c.h.b16 %v159
    %v402 = vunpack.c.l.b16 %v160
    %v403 = vunpack.c.h.b16 %v160
    %v404 = vunpack.c.l.b16 %v161
    %v405 = vunpack.c.h.b16 %v161
    %v406 = vunpack.c.l.b16 %v162
    %v407 = vunpack.c.h.b16 %v162
    %v408 = vunpack.c.l.b16 %v163
    %v409 = vunpack.c.h.b16 %v163
    %v410 = vunpack.c.l.b16 %v164
    %v411 = vunpack.c.h.b16 %v164
    %v412 = vunpack.c.l.b16 %v165
    %v413 = vunpack.c.h.b16 %v165
    %v414 = vunpack.c.l.b16 %v166
    %v415 = vunpack.c.h.b16 %v166
    %v416 = vunpack.c.l.b16 %v167
    %v417 = vunpack.c.h.b16 %v167
    %v418 = vunpack.c.l.b16 %v168
    %v419 = vunpack.c.h.b16 %v168
    %v420 = vunpack.c.l.b16 %v169
    %v421 = vunpack.c.h.b16 %v169
    %v422 = vunpack.c.l.b16 %v170
    %v423 = vunpack.c.h.b16 %v170
    %v424 = vunpack.c.l.b16 %v171
    %v425 = vunpack.c.h.b16 %v171
    %v426 = vunpack.c.l.b16 %v172
    %v427 = vunpack.c.h.b16 %v172
    %v428 = vunpack.c.l.b16 %v173
    %v429 = vunpack.c.h.b16 %v173
    %v430 = vunpack.c.l.b16 %v174
    %v431 = vunpack.c.h.b16 %v174
    %v432 = vunpack.c.l.b16 %v175
    %v433 = vunpack.c.h.b16 %v175
    %v434 = vunpack.c.l.b16 %v176
    %v435 = vunpack.c.h.b16 %v176
    %v436 = vunpack.c.l.b16 %v177
    %v437 = vunpack.c.h.b16 %v177
    %v438 = vunpack.c.l.b16 %v178
    %v439 = vunpack.c.h.b16 %v178
    %v440 = vunpack.c.l.b16 %v179
    %v441 = vunpack.c.h.b16 %v179
    %v442 = vunpack.c.l.b16 %v180
    %v443 = vunpack.c.h.b16 %v180
    %v444 = vunpack.c.l.b16 %v181
    %v445 = vunpack.c.h.b16 %v181
    %v446 = vunpack.c.l.b16 %v182
    %v447 = vunpack.c.h.b16 %v182
    %v448 = vunpack.c.l.b16 %v183
    %v449 = vunpack.c.h.b16 %v183
    %v450 = vunpack.c.l.b16 %v184
    %v451 = vunpack.c.h.b16 %v184
    %v452 = vunpack.c.l.b16 %v185
    %v453 = vunpack.c.h.b16 %v185
    %v454 = vunpack.c.l.b16 %v186
    %v455 = vunpack.c.h.b16 %v186
    %v456 = vunpack.c.l.b16 %v187
    %v457 = vunpack.c.h.b16 %v187
    %v458 = vunpack.c.l.b16 %v188
    %v459 = vunpack.c.h.b16 %v188
    %v460 = vunpack.c.l.b16 %v189
    %v461 = vunpack.c.h.b16 %v189
    %v462 = vunpack.c.l.b16 %v190
    %v463 = vunpack.c.h.b16 %v190
    %v464 = vunpack.c.l.b16 %v191
    %v465 = vunpack.c.h.b16 %v191
    %v466 = vunpack.c.l.b16 %v192
    %v467 = vunpack.c.h.b16 %v192
    %v468 = vunpack.c.l.b16 %v193
    %v469 = vunpack.c.h.b16 %v193
    %v470 = vunpack.c.l.b16 %v194
    %v471 = vunpack.c.h.b16 %v194
    %v472 = vunpack.c.l.b16 %v195
    %v473 = vunpack.c.h.b16 %v195
    %v474 = vunpack.c.l.b16 %v196
    %v475 = vunpack.c.h.b16 %v196
    %v476 = vunpack.c.l.b16 %v197
    %v477 = vunpack.c.h.b16 %v197
    %v478 = vunpack.c.l.b16 %v198
    %v479 = vunpack.c.h.b16 %v198
    %v480 = vunpack.c.l.b16 %v199
    %v481 = vunpack.c.h.b16 %v199
    %v482 = vunpack.c.l.b16 %v200
    %v483 = vunpack.c.h.b16 %v200
    %v484 = vunpack.c.l.b16 %v201
    %v485 = vunpack.c.h.b16 %v201
    %v486 = vunpack.c.l.b16 %v202
    %v487 = vunpack.c.h.b16 %v202
    %v488 = vunpack.c.l.b16 %v203
    %v489 = vunpack.c.h.b16 %v203
    %v490 = vunpack.c.l.b16 %v204
    %v491 = vunpack.c.h.b16 %v204
    %v492 = vunpack.c.l.b16 %v205
    %v493 = vunpack.c.h.b16 %v205
    %v494 = vunpack.c.l.b16 %v206
    %v495 = vunpack.c.h.b16 %v206
    %v496 = vunpack.c.l.b16 %v207
    %v497 = vunpack.c.h.b16 %v207
    %v498 = vunpack.c.l.b16 %v208
    %v499 = vunpack.c.h.b16 %v208
    %v500 = vunpack.c.l.b16 %v209
    %v501 = vunpack.c.h.b16 %v209
    %v502 = vunpack.c.l.b16 %v210
    %v503 = vunpack.c.h.b16 %v210
    %v504 = vunpack.c.l.b16 %v211
    %v505 = vunpack.c.h.b16 %v211
    %v506 = vunpack.c.l.b16 %v212
    %v507 = vunpack.c.h.b16 %v212
    %v508 = vunpack.c.l.b16 %v213
    %v509 = vunpack.c.h.b16 %v213
    %v510 = vunpack.c.l.b16 %v214
    %v511 = vunpack.c.h.b16 %v214
    %v512 = vunpack.c.l.b16 %v215
    %v513 = vunpack.c.h.b16 %v215
    %v514 = vunpack.c.l.b16 %v216
    %v515 = vunpack.c.h.b16 %v216
    %v516 = vunpack.c.l.b16 %v217
    %v517 = vunpack.c.h.b16 %v217
    %v518 = vpack.c.b16 %v328, %v326
    %v519 = vpack.c.b16 %v329, %v327
    %v520 = vpack.c.b16 %v332, %v330
    %v521 = vpack.c.b16 %v333, %v331
    %v522 = vpack.c.b16 %v336, %v334
    %v523 = vpack.c.b16 %v337, %v335
    %v524 = vpack.c.b16 %v340, %v338
    %v525 = vpack.c.b16 %v341, %v339
    %v526 = vpack.c.b16 %v344, %v342
    %v527 = vpack.c.b16 %v345, %v343
    %v528 = vpack.c.b16 %v348, %v346
    %v529 = vpack.c.b16 %v349, %v347
    %v530 = vpack.c.b16 %v352, %v350
    %v531 = vpack.c.b16 %v353, %v351
    %v532 = vpack.c.b16 %v356, %v354
    %v533 = vpack.c.b16 %v357, %v355
    %v534 = vpack.c.b16 %v360, %v358
    %v535 = vpack.c.b16 %v361, %v359
    %v536 = vpack.c.b16 %v364, %v362
    %v537 = vpack.c.b16 %v365, %v363
    %v538 = vpack.c.b16 %v368, %v366
    %v539 = vpack.c.b16 %v369, %v367
    %v540 = vpack.c.b16 %v372, %v370
    %v541 = vpack.c.b16 %v373, %v371
    %v542 = vpack.c.b16 %v376, %v374
    %v543 = vpack.c.b16 %v377, %v375
    %v544 = vpack.c.b16 %v380, %v378
    %v545 = vpack.c.b16 %v381, %v379
    %v546 = vpack.c.b16 %v384, %v382
    %v547 = vpack.c.b16 %v385, %v383
    %v548 = vpack.c.b16 %v388, %v386
    %v549 = vpack.c.b16 %v389, %v387
    %v550 = vpack.c.b16 %v392, %v390
    %v551 = vpack.c.b16 %v393, %v391
    %v552 = vpack.c.b16 %v396, %v394
    %v553 = vpack.c.b16 %v397, %v395
    %v554 = vpack.c.b16 %v400, %v398
    %v555 = vpack.c.b16 %v401, %v399
    %v556 = vpack.c.b16 %v404, %v402
    %v557 = vpack.c.b16 %v405, %v403
    %v558 = vpack.c.b16 %v408, %v406
    %v559 = vpack.c.b16 %v409, %v407
    %v560 = vpack.c.b16 %v412, %v410
    %v561 = vpack.c.b16 %v413, %v411
    %v562 = vpack.c.b16 %v416, %v414
    %v563 = vpack.c.b16 %v417, %v415
    %v564 = vpack.c.b16 %v420, %v418
    %v565 = vpack.c.b16 %v421, %v419
    %v566 = vpack.c.b16 %v424, %v422
    %v567 = vpack.c.b16 %v425, %v423
    %v568 = vpack.c.b16 %v428, %v426
    %v569 = vpack.c.b16 %v429, %v427
    %v570 = vpack.c.b16 %v432, %v430
    %v571 = vpack.c.b16 %v433, %v431
    %v572 = vpack.c.b16 %v436, %v434
    %v573 = vpack.c.b16 %v437, %v435
    %v574 = vpack.c.b16 %v440, %v438
    %v575 = vpack.c.b16 %v441, %v439
    %v576 = vpack.c.b16 %v444, %v442
    %v577 = vpack.c.b16 %v445, %v443
    %v578 = vpack.c.b16 %v448, %v446
    %v579 = vpack.c.b16 %v449, %v447
    %v580 = vpack.c.b16 %v452, %v450
    %v581 = vpack.c.b16 %v453, %v451
    %v582 = vpack.c.b16 %v456, %v454
    %v583 = vpack.c.b16 %v457, %v455
    %v584 = vpack.c.b16 %v460, %v458
    %v585 = vpack.c.b16 %v461, %v459
    %v586 = vpack.c.b16 %v464, %v462
    %v587 = vpack.c.b16 %v465, %v463
    %v588 = vpack.c.b16 %v468, %v466
    %v589 = vpack.c.b16 %v469, %v467
    %v590 = vpack.c.b16 %v472, %v470
    %v591 = vpack.c.b16 %v473, %v471
    %v592 = vpack.c.b16 %v476, %v474
    %v593 = vpack.c.b16 %v477, %v475
    %v594 = vpack.c.b16 %v480, %v478
    %v595 = vpack.c.b16 %v481, %v479
    %v596 = vpack.c.b16 %v484, %v482
    %v597 = vpack.c.b16 %v485, %v483
    %v598 = vpack.c.b16 %v488, %v486
    %v599 = vpack.c.b16 %v489, %v487
    %v600 = vpack.c.b16 %v492, %v490
    %v601 = vpack.c.b16 %v493, %v491
    %v602 = vpack.c.b16 %v496, %v494
    %v603 = vpack.c.b16 %v497, %v495
    %v604 = vpack.c.b16 %v500, %v498
    %v605 = vpack.c.b16 %v501, %v499
    %v606 = vpack.c.b16 %v504, %v502
    %v607 = vpack.c.b16 %v505, %v503
    %v608 = vpack.c.b16 %v508, %v506
    %v609 = vpack.c.b16 %v509, %v507
    %v610 = vpack.c.b16 %v512, %v510
    %v611 = vpack.c.b16 %v513, %v511
    %v612 = vpack.c.b16 %v516, %v514
    %v613 = vpack.c.b16 %v517, %v515
    %710 = vmatprep.subr.bf16.mxu0 %v533
    %711 = vmatpush1.bf16.msra.mxu0 %v532
    %712 = vmatprep.subr.bf16.mxu0 %v531
    %713 = vmatpush1.bf16.msra.mxu0 %v530
    %714 = vmatprep.subr.bf16.mxu0 %v529
    %715 = vmatpush1.bf16.msra.mxu0 %v528
    %716 = vmatprep.subr.bf16.mxu0 %v527
    %717 = vmatpush1.bf16.msra.mxu0 %v526
    %718 = vmatprep.subr.bf16.mxu0 %v525
    %719 = vmatpush1.bf16.msra.mxu0 %v524
    %720 = vmatprep.subr.bf16.mxu0 %v523
    %721 = vmatpush1.bf16.msra.mxu0 %v522
    %722 = vmatprep.subr.bf16.mxu0 %v521
    %723 = vmatpush1.bf16.msra.mxu0 %v520
    %724 = vmatprep.subr.bf16.mxu0 %v519
    %725 = vmatpush1.bf16.msra.mxu0 %v518
    %726 = vmatprep.subr.bf16.mxu0 %v549
    %727 = vmatpush2.bf16.msra.mxu0 %v548
    %728 = vmatprep.subr.bf16.mxu0 %v547
    %729 = vmatpush2.bf16.msra.mxu0 %v546
    %730 = vmatprep.subr.bf16.mxu0 %v545
    %731 = vmatpush2.bf16.msra.mxu0 %v544
    %732 = vmatprep.subr.bf16.mxu0 %v543
    %733 = vmatpush2.bf16.msra.mxu0 %v542
    %734 = vmatprep.subr.bf16.mxu0 %v541
    %735 = vmatpush2.bf16.msra.mxu0 %v540
    %736 = vmatprep.subr.bf16.mxu0 %v539
    %737 = vmatpush2.bf16.msra.mxu0 %v538
    %738 = vmatprep.subr.bf16.mxu0 %v537
    %739 = vmatpush2.bf16.msra.mxu0 %v536
    %740 = vmatprep.subr.bf16.mxu0 %v535
    %741 = vmatpush2.bf16.msra.mxu0 %v534
    %742 = vmatprep.mubr.bf16.mxu0 %v85
    %743 = vmatmul.mubr.bf16.gmra.mxu0 %v84
    %v744 = vpop.f32.mrf.mxu0
    %v745 = vadd.f32 %v223, %v744
    %v746 = vpop.f32.mrf.mxu0
    %v747 = vadd.f32 %v227, %v746
    %v748 = vpop.f32.mrf.mxu0
    %v749 = vpop.f32.mrf.mxu0
    %750 = vdwg.mxu0
    %751 = vmatprep.subr.bf16.mxu0 %v565
    %752 = vmatpush1.bf16.msra.mxu0 %v564
    %753 = vmatprep.subr.bf16.mxu0 %v563
    %754 = vmatpush1.bf16.msra.mxu0 %v562
    %755 = vmatprep.subr.bf16.mxu0 %v561
    %756 = vmatpush1.bf16.msra.mxu0 %v560
    %757 = vmatprep.subr.bf16.mxu0 %v559
    %758 = vmatpush1.bf16.msra.mxu0 %v558
    %759 = vmatprep.subr.bf16.mxu0 %v557
    %760 = vmatpush1.bf16.msra.mxu0 %v556
    %761 = vmatprep.subr.bf16.mxu0 %v555
    %762 = vmatpush1.bf16.msra.mxu0 %v554
    %763 = vmatprep.subr.bf16.mxu0 %v553
    %764 = vmatpush1.bf16.msra.mxu0 %v552
    %765 = vmatprep.subr.bf16.mxu0 %v551
    %766 = vmatpush1.bf16.msra.mxu0 %v550
    %767 = vmatprep.subr.bf16.mxu0 %v581
    %768 = vmatpush2.bf16.msra.mxu0 %v580
    %769 = vmatprep.subr.bf16.mxu0 %v579
    %770 = vmatpush2.bf16.msra.mxu0 %v578
    %771 = vmatprep.subr.bf16.mxu0 %v577
    %772 = vmatpush2.bf16.msra.mxu0 %v576
    %773 = vmatprep.subr.bf16.mxu0 %v575
    %774 = vmatpush2.bf16.msra.mxu0 %v574
    %775 = vmatprep.subr.bf16.mxu0 %v573
    %776 = vmatpush2.bf16.msra.mxu0 %v572
    %777 = vmatprep.subr.bf16.mxu0 %v571
    %778 = vmatpush2.bf16.msra.mxu0 %v570
    %779 = vmatprep.subr.bf16.mxu0 %v569
    %780 = vmatpush2.bf16.msra.mxu0 %v568
    %781 = vmatprep.subr.bf16.mxu0 %v567
    %782 = vmatpush2.bf16.msra.mxu0 %v566
    %783 = vmatprep.mubr.bf16.mxu0 %v87
    %784 = vmatmul.mubr.bf16.gmra.mxu0 %v86
    %v785 = vpop.f32.mrf.mxu0
    %v786 = vadd.f32 %v745, %v785
    %v787 = vpop.f32.mrf.mxu0
    %v788 = vadd.f32 %v747, %v787
    %v789 = vpop.f32.mrf.mxu0
    %v790 = vpop.f32.mrf.mxu0
    %791 = vdwg.mxu0
    %792 = vmatprep.subr.bf16.mxu0 %v597
    %793 = vmatpush1.bf16.msra.mxu0 %v596
    %794 = vmatprep.subr.bf16.mxu0 %v595
    %795 = vmatpush1.bf16.msra.mxu0 %v594
    %796 = vmatprep.subr.bf16.mxu0 %v593
    %797 = vmatpush1.bf16.msra.mxu0 %v592
    %798 = vmatprep.subr.bf16.mxu0 %v591
    %799 = vmatpush1.bf16.msra.mxu0 %v590
    %800 = vmatprep.subr.bf16.mxu0 %v589
    %801 = vmatpush1.bf16.msra.mxu0 %v588
    %802 = vmatprep.subr.bf16.mxu0 %v587
    %803 = vmatpush1.bf16.msra.mxu0 %v586
    %804 = vmatprep.subr.bf16.mxu0 %v585
    %805 = vmatpush1.bf16.msra.mxu0 %v584
    %806 = vmatprep.subr.bf16.mxu0 %v583
    %807 = vmatpush1.bf16.msra.mxu0 %v582
    %808 = vmatprep.subr.bf16.mxu0 %v613
    %809 = vmatpush2.bf16.msra.mxu0 %v612
    %810 = vmatprep.subr.bf16.mxu0 %v611
    %811 = vmatpush2.bf16.msra.mxu0 %v610
    %812 = vmatprep.subr.bf16.mxu0 %v609
    %813 = vmatpush2.bf16.msra.mxu0 %v608
    %814 = vmatprep.subr.bf16.mxu0 %v607
    %815 = vmatpush2.bf16.msra.mxu0 %v606
    %816 = vmatprep.subr.bf16.mxu0 %v605
    %817 = vmatpush2.bf16.msra.mxu0 %v604
    %818 = vmatprep.subr.bf16.mxu0 %v603
    %819 = vmatpush2.bf16.msra.mxu0 %v602
    %820 = vmatprep.subr.bf16.mxu0 %v601
    %821 = vmatpush2.bf16.msra.mxu0 %v600
    %822 = vmatprep.subr.bf16.mxu0 %v599
    %823 = vmatpush2.bf16.msra.mxu0 %v598
    %824 = vmatprep.mubr.bf16.mxu0 %v89
    %825 = vmatmul.mubr.bf16.gmra.mxu0 %v88
    %v826 = vpop.f32.mrf.mxu0
    %v827 = vadd.f32 %v786, %v826
    %v828 = vpop.f32.mrf.mxu0
    %v829 = vadd.f32 %v788, %v828
    %v830 = vpop.f32.mrf.mxu0
    %v831 = vpop.f32.mrf.mxu0
    %832 = vdwg.mxu0
    %833 = vst [vmem:[#allocation10] sm:$0xff] %v827
    %834 = vst [vmem:[#allocation10 + $0x8] sm:$0xff] %v829
    %v835 = vld [vmem:[#allocation8] sm:$0xff]
    %v836 = vld [vmem:[#allocation8 + $0x8] sm:$0xff]
    %v837 = vld [vmem:[#allocation8 + $0x10] sm:$0xff]
    %v838 = vld [vmem:[#allocation8 + $0x18] sm:$0xff]
    %v839 = vld [vmem:[#allocation8 + $0x20] sm:$0xff]
    %v840 = vld [vmem:[#allocation8 + $0x28] sm:$0xff]
    %v841 = vld [vmem:[#allocation8 + $0x30] sm:$0xff]
    %v842 = vld [vmem:[#allocation8 + $0x38] sm:$0xff]
    %v843 = vld [vmem:[#allocation8 + $0x40] sm:$0xff]
    %v844 = vld [vmem:[#allocation8 + $0x48] sm:$0xff]
    %v845 = vld [vmem:[#allocation8 + $0x50] sm:$0xff]
    %v846 = vld [vmem:[#allocation8 + $0x58] sm:$0xff]
    %v847 = vld [vmem:[#allocation8 + $0x60] sm:$0xff]
    %v848 = vld [vmem:[#allocation8 + $0x68] sm:$0xff]
    %v849 = vld [vmem:[#allocation8 + $0x70] sm:$0xff]
    %v850 = vld [vmem:[#allocation8 + $0x78] sm:$0xff]
    %v851 = vld [vmem:[#allocation8 + $0x80] sm:$0xff]
    %v852 = vld [vmem:[#allocation8 + $0x88] sm:$0xff]
    %v853 = vld [vmem:[#allocation8 + $0x90] sm:$0xff]
    %v854 = vld [vmem:[#allocation8 + $0x98] sm:$0xff]
    %v855 = vld [vmem:[#allocation8 + $0xa0] sm:$0xff]
    %v856 = vld [vmem:[#allocation8 + $0xa8] sm:$0xff]
    %v857 = vld [vmem:[#allocation8 + $0xb0] sm:$0xff]
    %v858 = vld [vmem:[#allocation8 + $0xb8] sm:$0xff]
    %v859 = vld [vmem:[#allocation8 + $0xc0] sm:$0xff]
    %v860 = vld [vmem:[#allocation8 + $0xc8] sm:$0xff]
    %v861 = vld [vmem:[#allocation8 + $0xd0] sm:$0xff]
    %v862 = vld [vmem:[#allocation8 + $0xd8] sm:$0xff]
    %v863 = vld [vmem:[#allocation8 + $0xe0] sm:$0xff]
    %v864 = vld [vmem:[#allocation8 + $0xe8] sm:$0xff]
    %v865 = vld [vmem:[#allocation8 + $0xf0] sm:$0xff]
    %v866 = vld [vmem:[#allocation8 + $0xf8] sm:$0xff]
    %v867 = vld [vmem:[#allocation8 + $0x100] sm:$0xff]
    %v868 = vld [vmem:[#allocation8 + $0x108] sm:$0xff]
    %v869 = vld [vmem:[#allocation8 + $0x110] sm:$0xff]
    %v870 = vld [vmem:[#allocation8 + $0x118] sm:$0xff]
    %v871 = vld [vmem:[#allocation8 + $0x120] sm:$0xff]
    %v872 = vld [vmem:[#allocation8 + $0x128] sm:$0xff]
    %v873 = vld [vmem:[#allocation8 + $0x130] sm:$0xff]
    %v874 = vld [vmem:[#allocation8 + $0x138] sm:$0xff]
    %v875 = vld [vmem:[#allocation8 + $0x140] sm:$0xff]
    %v876 = vld [vmem:[#allocation8 + $0x148] sm:$0xff]
    %v877 = vld [vmem:[#allocation8 + $0x150] sm:$0xff]
    %v878 = vld [vmem:[#allocation8 + $0x158] sm:$0xff]
    %v879 = vld [vmem:[#allocation8 + $0x160] sm:$0xff]
    %v880 = vld [vmem:[#allocation8 + $0x168] sm:$0xff]
    %v881 = vld [vmem:[#allocation8 + $0x170] sm:$0xff]
    %v882 = vld [vmem:[#allocation8 + $0x178] sm:$0xff]
    %v883 = vld [vmem:[#allocation8 + $0x180] sm:$0xff]
    %v884 = vld [vmem:[#allocation8 + $0x188] sm:$0xff]
    %v885 = vld [vmem:[#allocation8 + $0x190] sm:$0xff]
    %v886 = vld [vmem:[#allocation8 + $0x198] sm:$0xff]
    %v887 = vld [vmem:[#allocation8 + $0x1a0] sm:$0xff]
    %v888 = vld [vmem:[#allocation8 + $0x1a8] sm:$0xff]
    %v889 = vld [vmem:[#allocation8 + $0x1b0] sm:$0xff]
    %v890 = vld [vmem:[#allocation8 + $0x1b8] sm:$0xff]
    %v891 = vld [vmem:[#allocation8 + $0x1c0] sm:$0xff]
    %v892 = vld [vmem:[#allocation8 + $0x1c8] sm:$0xff]
    %v893 = vld [vmem:[#allocation8 + $0x1d0] sm:$0xff]
    %v894 = vld [vmem:[#allocation8 + $0x1d8] sm:$0xff]
    %v895 = vld [vmem:[#allocation8 + $0x1e0] sm:$0xff]
    %v896 = vld [vmem:[#allocation8 + $0x1e8] sm:$0xff]
    %v897 = vld [vmem:[#allocation8 + $0x1f0] sm:$0xff]
    %v898 = vld [vmem:[#allocation8 + $0x1f8] sm:$0xff]
    %v899 = vld [vmem:[#allocation8 + $0x200] sm:$0xff]
    %v900 = vld [vmem:[#allocation8 + $0x208] sm:$0xff]
    %v901 = vld [vmem:[#allocation8 + $0x210] sm:$0xff]
    %v902 = vld [vmem:[#allocation8 + $0x218] sm:$0xff]
    %v903 = vld [vmem:[#allocation8 + $0x220] sm:$0xff]
    %v904 = vld [vmem:[#allocation8 + $0x228] sm:$0xff]
    %v905 = vld [vmem:[#allocation8 + $0x230] sm:$0xff]
    %v906 = vld [vmem:[#allocation8 + $0x238] sm:$0xff]
    %v907 = vld [vmem:[#allocation8 + $0x240] sm:$0xff]
    %v908 = vld [vmem:[#allocation8 + $0x248] sm:$0xff]
    %v909 = vld [vmem:[#allocation8 + $0x250] sm:$0xff]
    %v910 = vld [vmem:[#allocation8 + $0x258] sm:$0xff]
    %v911 = vld [vmem:[#allocation8 + $0x260] sm:$0xff]
    %v912 = vld [vmem:[#allocation8 + $0x268] sm:$0xff]
    %v913 = vld [vmem:[#allocation8 + $0x270] sm:$0xff]
    %v914 = vld [vmem:[#allocation8 + $0x278] sm:$0xff]
    %v915 = vld [vmem:[#allocation8 + $0x280] sm:$0xff]
    %v916 = vld [vmem:[#allocation8 + $0x288] sm:$0xff]
    %v917 = vld [vmem:[#allocation8 + $0x290] sm:$0xff]
    %v918 = vld [vmem:[#allocation8 + $0x298] sm:$0xff]
    %v919 = vld [vmem:[#allocation8 + $0x2a0] sm:$0xff]
    %v920 = vld [vmem:[#allocation8 + $0x2a8] sm:$0xff]
    %v921 = vld [vmem:[#allocation8 + $0x2b0] sm:$0xff]
    %v922 = vld [vmem:[#allocation8 + $0x2b8] sm:$0xff]
    %v923 = vld [vmem:[#allocation8 + $0x2c0] sm:$0xff]
    %v924 = vld [vmem:[#allocation8 + $0x2c8] sm:$0xff]
    %v925 = vld [vmem:[#allocation8 + $0x2d0] sm:$0xff]
    %v926 = vld [vmem:[#allocation8 + $0x2d8] sm:$0xff]
    %v927 = vld [vmem:[#allocation8 + $0x2e0] sm:$0xff]
    %v928 = vld [vmem:[#allocation8 + $0x2e8] sm:$0xff]
    %v929 = vld [vmem:[#allocation8 + $0x2f0] sm:$0xff]
    %v930 = vld [vmem:[#allocation8 + $0x2f8] sm:$0xff]
    %v931 = vld [vmem:[#allocation8 + $0x300] sm:$0xff]
    %v932 = vld [vmem:[#allocation8 + $0x308] sm:$0xff]
    %v933 = vld [vmem:[#allocation8 + $0x310] sm:$0xff]
    %v934 = vld [vmem:[#allocation8 + $0x318] sm:$0xff]
    %v935 = vld [vmem:[#allocation8 + $0x320] sm:$0xff]
    %v936 = vld [vmem:[#allocation8 + $0x328] sm:$0xff]
    %v937 = vld [vmem:[#allocation8 + $0x330] sm:$0xff]
    %v938 = vld [vmem:[#allocation8 + $0x338] sm:$0xff]
    %v939 = vld [vmem:[#allocation8 + $0x340] sm:$0xff]
    %v940 = vld [vmem:[#allocation8 + $0x348] sm:$0xff]
    %v941 = vld [vmem:[#allocation8 + $0x350] sm:$0xff]
    %v942 = vld [vmem:[#allocation8 + $0x358] sm:$0xff]
    %v943 = vld [vmem:[#allocation8 + $0x360] sm:$0xff]
    %v944 = vld [vmem:[#allocation8 + $0x368] sm:$0xff]
    %v945 = vld [vmem:[#allocation8 + $0x370] sm:$0xff]
    %v946 = vld [vmem:[#allocation8 + $0x378] sm:$0xff]
    %v947 = vld [vmem:[#allocation8 + $0x380] sm:$0xff]
    %v948 = vld [vmem:[#allocation8 + $0x388] sm:$0xff]
    %v949 = vld [vmem:[#allocation8 + $0x390] sm:$0xff]
    %v950 = vld [vmem:[#allocation8 + $0x398] sm:$0xff]
    %v951 = vld [vmem:[#allocation8 + $0x3a0] sm:$0xff]
    %v952 = vld [vmem:[#allocation8 + $0x3a8] sm:$0xff]
    %v953 = vld [vmem:[#allocation8 + $0x3b0] sm:$0xff]
    %v954 = vld [vmem:[#allocation8 + $0x3b8] sm:$0xff]
    %v955 = vld [vmem:[#allocation8 + $0x3c0] sm:$0xff]
    %v956 = vld [vmem:[#allocation8 + $0x3c8] sm:$0xff]
    %v957 = vld [vmem:[#allocation8 + $0x3d0] sm:$0xff]
    %v958 = vld [vmem:[#allocation8 + $0x3d8] sm:$0xff]
    %v959 = vld [vmem:[#allocation8 + $0x3e0] sm:$0xff]
    %v960 = vld [vmem:[#allocation8 + $0x3e8] sm:$0xff]
    %v961 = vld [vmem:[#allocation8 + $0x3f0] sm:$0xff]
    %v962 = vld [vmem:[#allocation8 + $0x3f8] sm:$0xff]
    %v963 = vld [vmem:[#allocation8 + $0x400] sm:$0xff]
    %v964 = vld [vmem:[#allocation8 + $0x408] sm:$0xff]
    %v965 = vld [vmem:[#allocation8 + $0x410] sm:$0xff]
    %v966 = vld [vmem:[#allocation8 + $0x418] sm:$0xff]
    %v967 = vld [vmem:[#allocation8 + $0x420] sm:$0xff]
    %v968 = vld [vmem:[#allocation8 + $0x428] sm:$0xff]
    %v969 = vld [vmem:[#allocation8 + $0x430] sm:$0xff]
    %v970 = vld [vmem:[#allocation8 + $0x438] sm:$0xff]
    %v971 = vld [vmem:[#allocation8 + $0x440] sm:$0xff]
    %v972 = vld [vmem:[#allocation8 + $0x448] sm:$0xff]
    %v973 = vld [vmem:[#allocation8 + $0x450] sm:$0xff]
    %v974 = vld [vmem:[#allocation8 + $0x458] sm:$0xff]
    %v975 = vld [vmem:[#allocation8 + $0x460] sm:$0xff]
    %v976 = vld [vmem:[#allocation8 + $0x468] sm:$0xff]
    %v977 = vld [vmem:[#allocation8 + $0x470] sm:$0xff]
    %v978 = vld [vmem:[#allocation8 + $0x478] sm:$0xff]
    %v979 = vld [vmem:[#allocation8 + $0x480] sm:$0xff]
    %v980 = vld [vmem:[#allocation8 + $0x488] sm:$0xff]
    %v981 = vld [vmem:[#allocation8 + $0x490] sm:$0xff]
    %v982 = vld [vmem:[#allocation8 + $0x498] sm:$0xff]
    %v983 = vld [vmem:[#allocation8 + $0x4a0] sm:$0xff]
    %v984 = vld [vmem:[#allocation8 + $0x4a8] sm:$0xff]
    %v985 = vld [vmem:[#allocation8 + $0x4b0] sm:$0xff]
    %v986 = vld [vmem:[#allocation8 + $0x4b8] sm:$0xff]
    %v987 = vld [vmem:[#allocation8 + $0x4c0] sm:$0xff]
    %v988 = vld [vmem:[#allocation8 + $0x4c8] sm:$0xff]
    %v989 = vld [vmem:[#allocation8 + $0x4d0] sm:$0xff]
    %v990 = vld [vmem:[#allocation8 + $0x4d8] sm:$0xff]
    %v991 = vld [vmem:[#allocation8 + $0x4e0] sm:$0xff]
    %v992 = vld [vmem:[#allocation8 + $0x4e8] sm:$0xff]
    %v993 = vld [vmem:[#allocation8 + $0x4f0] sm:$0xff]
    %v994 = vld [vmem:[#allocation8 + $0x4f8] sm:$0xff]
    %v995 = vld [vmem:[#allocation8 + $0x500] sm:$0xff]
    %v996 = vld [vmem:[#allocation8 + $0x508] sm:$0xff]
    %v997 = vld [vmem:[#allocation8 + $0x510] sm:$0xff]
    %v998 = vld [vmem:[#allocation8 + $0x518] sm:$0xff]
    %v999 = vld [vmem:[#allocation8 + $0x520] sm:$0xff]
    %v1000 = vld [vmem:[#allocation8 + $0x528] sm:$0xff]
    %v1001 = vld [vmem:[#allocation8 + $0x530] sm:$0xff]
    %v1002 = vld [vmem:[#allocation8 + $0x538] sm:$0xff]
    %v1003 = vld [vmem:[#allocation8 + $0x540] sm:$0xff]
    %v1004 = vld [vmem:[#allocation8 + $0x548] sm:$0xff]
    %v1005 = vld [vmem:[#allocation8 + $0x550] sm:$0xff]
    %v1006 = vld [vmem:[#allocation8 + $0x558] sm:$0xff]
    %v1007 = vld [vmem:[#allocation8 + $0x560] sm:$0xff]
    %v1008 = vld [vmem:[#allocation8 + $0x568] sm:$0xff]
    %v1009 = vld [vmem:[#allocation8 + $0x570] sm:$0xff]
    %v1010 = vld [vmem:[#allocation8 + $0x578] sm:$0xff]
    %v1011 = vld [vmem:[#allocation8 + $0x580] sm:$0xff]
    %v1012 = vld [vmem:[#allocation8 + $0x588] sm:$0xff]
    %v1013 = vld [vmem:[#allocation8 + $0x590] sm:$0xff]
    %v1014 = vld [vmem:[#allocation8 + $0x598] sm:$0xff]
    %v1015 = vld [vmem:[#allocation8 + $0x5a0] sm:$0xff]
    %v1016 = vld [vmem:[#allocation8 + $0x5a8] sm:$0xff]
    %v1017 = vld [vmem:[#allocation8 + $0x5b0] sm:$0xff]
    %v1018 = vld [vmem:[#allocation8 + $0x5b8] sm:$0xff]
    %v1019 = vld [vmem:[#allocation8 + $0x5c0] sm:$0xff]
    %v1020 = vld [vmem:[#allocation8 + $0x5c8] sm:$0xff]
    %v1021 = vld [vmem:[#allocation8 + $0x5d0] sm:$0xff]
    %v1022 = vld [vmem:[#allocation8 + $0x5d8] sm:$0xff]
    %v1023 = vld [vmem:[#allocation8 + $0x5e0] sm:$0xff]
    %v1024 = vld [vmem:[#allocation8 + $0x5e8] sm:$0xff]
    %v1025 = vld [vmem:[#allocation8 + $0x5f0] sm:$0xff]
    %v1026 = vld [vmem:[#allocation8 + $0x5f8] sm:$0xff]
    %v1027 = vld [vmem:[#allocation8 + $0x600] sm:$0xff]
    %v1028 = vld [vmem:[#allocation8 + $0x608] sm:$0xff]
    %v1029 = vld [vmem:[#allocation8 + $0x610] sm:$0xff]
    %v1030 = vld [vmem:[#allocation8 + $0x618] sm:$0xff]
    %v1031 = vld [vmem:[#allocation8 + $0x620] sm:$0xff]
    %v1032 = vld [vmem:[#allocation8 + $0x628] sm:$0xff]
    %v1033 = vld [vmem:[#allocation8 + $0x630] sm:$0xff]
    %v1034 = vld [vmem:[#allocation8 + $0x638] sm:$0xff]
    %v1035 = vld [vmem:[#allocation8 + $0x640] sm:$0xff]
    %v1036 = vld [vmem:[#allocation8 + $0x648] sm:$0xff]
    %v1037 = vld [vmem:[#allocation8 + $0x650] sm:$0xff]
    %v1038 = vld [vmem:[#allocation8 + $0x658] sm:$0xff]
    %v1039 = vld [vmem:[#allocation8 + $0x660] sm:$0xff]
    %v1040 = vld [vmem:[#allocation8 + $0x668] sm:$0xff]
    %v1041 = vld [vmem:[#allocation8 + $0x670] sm:$0xff]
    %v1042 = vld [vmem:[#allocation8 + $0x678] sm:$0xff]
    %v1043 = vld [vmem:[#allocation8 + $0x680] sm:$0xff]
    %v1044 = vld [vmem:[#allocation8 + $0x688] sm:$0xff]
    %v1045 = vld [vmem:[#allocation8 + $0x690] sm:$0xff]
    %v1046 = vld [vmem:[#allocation8 + $0x698] sm:$0xff]
    %v1047 = vld [vmem:[#allocation8 + $0x6a0] sm:$0xff]
    %v1048 = vld [vmem:[#allocation8 + $0x6a8] sm:$0xff]
    %v1049 = vld [vmem:[#allocation8 + $0x6b0] sm:$0xff]
    %v1050 = vld [vmem:[#allocation8 + $0x6b8] sm:$0xff]
    %v1051 = vld [vmem:[#allocation8 + $0x6c0] sm:$0xff]
    %v1052 = vld [vmem:[#allocation8 + $0x6c8] sm:$0xff]
    %v1053 = vld [vmem:[#allocation8 + $0x6d0] sm:$0xff]
    %v1054 = vld [vmem:[#allocation8 + $0x6d8] sm:$0xff]
    %v1055 = vld [vmem:[#allocation8 + $0x6e0] sm:$0xff]
    %v1056 = vld [vmem:[#allocation8 + $0x6e8] sm:$0xff]
    %v1057 = vld [vmem:[#allocation8 + $0x6f0] sm:$0xff]
    %v1058 = vld [vmem:[#allocation8 + $0x6f8] sm:$0xff]
    %v1059 = vld [vmem:[#allocation8 + $0x700] sm:$0xff]
    %v1060 = vld [vmem:[#allocation8 + $0x708] sm:$0xff]
    %v1061 = vld [vmem:[#allocation8 + $0x710] sm:$0xff]
    %v1062 = vld [vmem:[#allocation8 + $0x718] sm:$0xff]
    %v1063 = vld [vmem:[#allocation8 + $0x720] sm:$0xff]
    %v1064 = vld [vmem:[#allocation8 + $0x728] sm:$0xff]
    %v1065 = vld [vmem:[#allocation8 + $0x730] sm:$0xff]
    %v1066 = vld [vmem:[#allocation8 + $0x738] sm:$0xff]
    %v1067 = vld [vmem:[#allocation8 + $0x740] sm:$0xff]
    %v1068 = vld [vmem:[#allocation8 + $0x748] sm:$0xff]
    %v1069 = vld [vmem:[#allocation8 + $0x750] sm:$0xff]
    %v1070 = vld [vmem:[#allocation8 + $0x758] sm:$0xff]
    %v1071 = vld [vmem:[#allocation8 + $0x760] sm:$0xff]
    %v1072 = vld [vmem:[#allocation8 + $0x768] sm:$0xff]
    %v1073 = vld [vmem:[#allocation8 + $0x770] sm:$0xff]
    %v1074 = vld [vmem:[#allocation8 + $0x778] sm:$0xff]
    %v1075 = vld [vmem:[#allocation8 + $0x780] sm:$0xff]
    %v1076 = vld [vmem:[#allocation8 + $0x788] sm:$0xff]
    %v1077 = vld [vmem:[#allocation8 + $0x790] sm:$0xff]
    %v1078 = vld [vmem:[#allocation8 + $0x798] sm:$0xff]
    %v1079 = vld [vmem:[#allocation8 + $0x7a0] sm:$0xff]
    %v1080 = vld [vmem:[#allocation8 + $0x7a8] sm:$0xff]
    %v1081 = vld [vmem:[#allocation8 + $0x7b0] sm:$0xff]
    %v1082 = vld [vmem:[#allocation8 + $0x7b8] sm:$0xff]
    %v1083 = vld [vmem:[#allocation8 + $0x7c0] sm:$0xff]
    %v1084 = vld [vmem:[#allocation8 + $0x7c8] sm:$0xff]
    %v1085 = vld [vmem:[#allocation8 + $0x7d0] sm:$0xff]
    %v1086 = vld [vmem:[#allocation8 + $0x7d8] sm:$0xff]
    %v1087 = vld [vmem:[#allocation8 + $0x7e0] sm:$0xff]
    %v1088 = vld [vmem:[#allocation8 + $0x7e8] sm:$0xff]
    %v1089 = vld [vmem:[#allocation8 + $0x7f0] sm:$0xff]
    %v1090 = vld [vmem:[#allocation8 + $0x7f8] sm:$0xff]
    %v1091 = vld [vmem:[%s5] sm:$0x3]
    %v1093 = vlaneseq
    %v1094 = vshrl.u32 %v1093, 7
    %v1095 = vsub.s32 0, %v1094
    %v1096 = vrot.slane %v1091, %v1095
    %v1097 = vlaneseq
    %v1098 = vshrl.u32 %v1097, 7
    %v1099 = vsub.s32 1, %v1098
    %v1100 = vrot.slane %v1091, %v1099
    %v1359 = vunpack.c.l.b16 %v835
    %v1360 = vunpack.c.h.b16 %v835
    %v1361 = vunpack.c.l.b16 %v836
    %v1362 = vunpack.c.h.b16 %v836
    %v1363 = vunpack.c.l.b16 %v837
    %v1364 = vunpack.c.h.b16 %v837
    %v1365 = vunpack.c.l.b16 %v838
    %v1366 = vunpack.c.h.b16 %v838
    %v1367 = vunpack.c.l.b16 %v839
    %v1368 = vunpack.c.h.b16 %v839
    %v1369 = vunpack.c.l.b16 %v840
    %v1370 = vunpack.c.h.b16 %v840
    %v1371 = vunpack.c.l.b16 %v841
    %v1372 = vunpack.c.h.b16 %v841
    %v1373 = vunpack.c.l.b16 %v842
    %v1374 = vunpack.c.h.b16 %v842
    %v1375 = vunpack.c.l.b16 %v843
    %v1376 = vunpack.c.h.b16 %v843
    %v1377 = vunpack.c.l.b16 %v844
    %v1378 = vunpack.c.h.b16 %v844
    %v1379 = vunpack.c.l.b16 %v845
    %v1380 = vunpack.c.h.b16 %v845
    %v1381 = vunpack.c.l.b16 %v846
    %v1382 = vunpack.c.h.b16 %v846
    %v1383 = vunpack.c.l.b16 %v847
    %v1384 = vunpack.c.h.b16 %v847
    %v1385 = vunpack.c.l.b16 %v848
    %v1386 = vunpack.c.h.b16 %v848
    %v1387 = vunpack.c.l.b16 %v849
    %v1388 = vunpack.c.h.b16 %v849
    %v1389 = vunpack.c.l.b16 %v850
    %v1390 = vunpack.c.h.b16 %v850
    %v1391 = vunpack.c.l.b16 %v851
    %v1392 = vunpack.c.h.b16 %v851
    %v1393 = vunpack.c.l.b16 %v852
    %v1394 = vunpack.c.h.b16 %v852
    %v1395 = vunpack.c.l.b16 %v853
    %v1396 = vunpack.c.h.b16 %v853
    %v1397 = vunpack.c.l.b16 %v854
    %v1398 = vunpack.c.h.b16 %v854
    %v1399 = vunpack.c.l.b16 %v855
    %v1400 = vunpack.c.h.b16 %v855
    %v1401 = vunpack.c.l.b16 %v856
    %v1402 = vunpack.c.h.b16 %v856
    %v1403 = vunpack.c.l.b16 %v857
    %v1404 = vunpack.c.h.b16 %v857
    %v1405 = vunpack.c.l.b16 %v858
    %v1406 = vunpack.c.h.b16 %v858
    %v1407 = vunpack.c.l.b16 %v859
    %v1408 = vunpack.c.h.b16 %v859
    %v1409 = vunpack.c.l.b16 %v860
    %v1410 = vunpack.c.h.b16 %v860
    %v1411 = vunpack.c.l.b16 %v861
    %v1412 = vunpack.c.h.b16 %v861
    %v1413 = vunpack.c.l.b16 %v862
    %v1414 = vunpack.c.h.b16 %v862
    %v1415 = vunpack.c.l.b16 %v863
    %v1416 = vunpack.c.h.b16 %v863
    %v1417 = vunpack.c.l.b16 %v864
    %v1418 = vunpack.c.h.b16 %v864
    %v1419 = vunpack.c.l.b16 %v865
    %v1420 = vunpack.c.h.b16 %v865
    %v1421 = vunpack.c.l.b16 %v866
    %v1422 = vunpack.c.h.b16 %v866
    %v1423 = vunpack.c.l.b16 %v867
    %v1424 = vunpack.c.h.b16 %v867
    %v1425 = vunpack.c.l.b16 %v868
    %v1426 = vunpack.c.h.b16 %v868
    %v1427 = vunpack.c.l.b16 %v869
    %v1428 = vunpack.c.h.b16 %v869
    %v1429 = vunpack.c.l.b16 %v870
    %v1430 = vunpack.c.h.b16 %v870
    %v1431 = vunpack.c.l.b16 %v871
    %v1432 = vunpack.c.h.b16 %v871
    %v1433 = vunpack.c.l.b16 %v872
    %v1434 = vunpack.c.h.b16 %v872
    %v1435 = vunpack.c.l.b16 %v873
    %v1436 = vunpack.c.h.b16 %v873
    %v1437 = vunpack.c.l.b16 %v874
    %v1438 = vunpack.c.h.b16 %v874
    %v1439 = vunpack.c.l.b16 %v875
    %v1440 = vunpack.c.h.b16 %v875
    %v1441 = vunpack.c.l.b16 %v876
    %v1442 = vunpack.c.h.b16 %v876
    %v1443 = vunpack.c.l.b16 %v877
    %v1444 = vunpack.c.h.b16 %v877
    %v1445 = vunpack.c.l.b16 %v878
    %v1446 = vunpack.c.h.b16 %v878
    %v1447 = vunpack.c.l.b16 %v879
    %v1448 = vunpack.c.h.b16 %v879
    %v1449 = vunpack.c.l.b16 %v880
    %v1450 = vunpack.c.h.b16 %v880
    %v1451 = vunpack.c.l.b16 %v881
    %v1452 = vunpack.c.h.b16 %v881
    %v1453 = vunpack.c.l.b16 %v882
    %v1454 = vunpack.c.h.b16 %v882
    %v1455 = vunpack.c.l.b16 %v883
    %v1456 = vunpack.c.h.b16 %v883
    %v1457 = vunpack.c.l.b16 %v884
    %v1458 = vunpack.c.h.b16 %v884
    %v1459 = vunpack.c.l.b16 %v885
    %v1460 = vunpack.c.h.b16 %v885
    %v1461 = vunpack.c.l.b16 %v886
    %v1462 = vunpack.c.h.b16 %v886
    %v1463 = vunpack.c.l.b16 %v887
    %v1464 = vunpack.c.h.b16 %v887
    %v1465 = vunpack.c.l.b16 %v888
    %v1466 = vunpack.c.h.b16 %v888
    %v1467 = vunpack.c.l.b16 %v889
    %v1468 = vunpack.c.h.b16 %v889
    %v1469 = vunpack.c.l.b16 %v890
    %v1470 = vunpack.c.h.b16 %v890
    %v1471 = vunpack.c.l.b16 %v891
    %v1472 = vunpack.c.h.b16 %v891
    %v1473 = vunpack.c.l.b16 %v892
    %v1474 = vunpack.c.h.b16 %v892
    %v1475 = vunpack.c.l.b16 %v893
    %v1476 = vunpack.c.h.b16 %v893
    %v1477 = vunpack.c.l.b16 %v894
    %v1478 = vunpack.c.h.b16 %v894
    %v1479 = vunpack.c.l.b16 %v895
    %v1480 = vunpack.c.h.b16 %v895
    %v1481 = vunpack.c.l.b16 %v896
    %v1482 = vunpack.c.h.b16 %v896
    %v1483 = vunpack.c.l.b16 %v897
    %v1484 = vunpack.c.h.b16 %v897
    %v1485 = vunpack.c.l.b16 %v898
    %v1486 = vunpack.c.h.b16 %v898
    %v1487 = vunpack.c.l.b16 %v899
    %v1488 = vunpack.c.h.b16 %v899
    %v1489 = vunpack.c.l.b16 %v900
    %v1490 = vunpack.c.h.b16 %v900
    %v1491 = vunpack.c.l.b16 %v901
    %v1492 = vunpack.c.h.b16 %v901
    %v1493 = vunpack.c.l.b16 %v902
    %v1494 = vunpack.c.h.b16 %v902
    %v1495 = vunpack.c.l.b16 %v903
    %v1496 = vunpack.c.h.b16 %v903
    %v1497 = vunpack.c.l.b16 %v904
    %v1498 = vunpack.c.h.b16 %v904
    %v1499 = vunpack.c.l.b16 %v905
    %v1500 = vunpack.c.h.b16 %v905
    %v1501 = vunpack.c.l.b16 %v906
    %v1502 = vunpack.c.h.b16 %v906
    %v1503 = vunpack.c.l.b16 %v907
    %v1504 = vunpack.c.h.b16 %v907
    %v1505 = vunpack.c.l.b16 %v908
    %v1506 = vunpack.c.h.b16 %v908
    %v1507 = vunpack.c.l.b16 %v909
    %v1508 = vunpack.c.h.b16 %v909
    %v1509 = vunpack.c.l.b16 %v910
    %v1510 = vunpack.c.h.b16 %v910
    %v1511 = vunpack.c.l.b16 %v911
    %v1512 = vunpack.c.h.b16 %v911
    %v1513 = vunpack.c.l.b16 %v912
    %v1514 = vunpack.c.h.b16 %v912
    %v1515 = vunpack.c.l.b16 %v913
    %v1516 = vunpack.c.h.b16 %v913
    %v1517 = vunpack.c.l.b16 %v914
    %v1518 = vunpack.c.h.b16 %v914
    %v1519 = vunpack.c.l.b16 %v915
    %v1520 = vunpack.c.h.b16 %v915
    %v1521 = vunpack.c.l.b16 %v916
    %v1522 = vunpack.c.h.b16 %v916
    %v1523 = vunpack.c.l.b16 %v917
    %v1524 = vunpack.c.h.b16 %v917
    %v1525 = vunpack.c.l.b16 %v918
    %v1526 = vunpack.c.h.b16 %v918
    %v1527 = vunpack.c.l.b16 %v919
    %v1528 = vunpack.c.h.b16 %v919
    %v1529 = vunpack.c.l.b16 %v920
    %v1530 = vunpack.c.h.b16 %v920
    %v1531 = vunpack.c.l.b16 %v921
    %v1532 = vunpack.c.h.b16 %v921
    %v1533 = vunpack.c.l.b16 %v922
    %v1534 = vunpack.c.h.b16 %v922
    %v1535 = vunpack.c.l.b16 %v923
    %v1536 = vunpack.c.h.b16 %v923
    %v1537 = vunpack.c.l.b16 %v924
    %v1538 = vunpack.c.h.b16 %v924
    %v1539 = vunpack.c.l.b16 %v925
    %v1540 = vunpack.c.h.b16 %v925
    %v1541 = vunpack.c.l.b16 %v926
    %v1542 = vunpack.c.h.b16 %v926
    %v1543 = vunpack.c.l.b16 %v927
    %v1544 = vunpack.c.h.b16 %v927
    %v1545 = vunpack.c.l.b16 %v928
    %v1546 = vunpack.c.h.b16 %v928
    %v1547 = vunpack.c.l.b16 %v929
    %v1548 = vunpack.c.h.b16 %v929
    %v1549 = vunpack.c.l.b16 %v930
    %v1550 = vunpack.c.h.b16 %v930
    %v1551 = vunpack.c.l.b16 %v931
    %v1552 = vunpack.c.h.b16 %v931
    %v1553 = vunpack.c.l.b16 %v932
    %v1554 = vunpack.c.h.b16 %v932
    %v1555 = vunpack.c.l.b16 %v933
    %v1556 = vunpack.c.h.b16 %v933
    %v1557 = vunpack.c.l.b16 %v934
    %v1558 = vunpack.c.h.b16 %v934
    %v1559 = vunpack.c.l.b16 %v935
    %v1560 = vunpack.c.h.b16 %v935
    %v1561 = vunpack.c.l.b16 %v936
    %v1562 = vunpack.c.h.b16 %v936
    %v1563 = vunpack.c.l.b16 %v937
    %v1564 = vunpack.c.h.b16 %v937
    %v1565 = vunpack.c.l.b16 %v938
    %v1566 = vunpack.c.h.b16 %v938
    %v1567 = vunpack.c.l.b16 %v939
    %v1568 = vunpack.c.h.b16 %v939
    %v1569 = vunpack.c.l.b16 %v940
    %v1570 = vunpack.c.h.b16 %v940
    %v1571 = vunpack.c.l.b16 %v941
    %v1572 = vunpack.c.h.b16 %v941
    %v1573 = vunpack.c.l.b16 %v942
    %v1574 = vunpack.c.h.b16 %v942
    %v1575 = vunpack.c.l.b16 %v943
    %v1576 = vunpack.c.h.b16 %v943
    %v1577 = vunpack.c.l.b16 %v944
    %v1578 = vunpack.c.h.b16 %v944
    %v1579 = vunpack.c.l.b16 %v945
    %v1580 = vunpack.c.h.b16 %v945
    %v1581 = vunpack.c.l.b16 %v946
    %v1582 = vunpack.c.h.b16 %v946
    %v1583 = vunpack.c.l.b16 %v947
    %v1584 = vunpack.c.h.b16 %v947
    %v1585 = vunpack.c.l.b16 %v948
    %v1586 = vunpack.c.h.b16 %v948
    %v1587 = vunpack.c.l.b16 %v949
    %v1588 = vunpack.c.h.b16 %v949
    %v1589 = vunpack.c.l.b16 %v950
    %v1590 = vunpack.c.h.b16 %v950
    %v1591 = vunpack.c.l.b16 %v951
    %v1592 = vunpack.c.h.b16 %v951
    %v1593 = vunpack.c.l.b16 %v952
    %v1594 = vunpack.c.h.b16 %v952
    %v1595 = vunpack.c.l.b16 %v953
    %v1596 = vunpack.c.h.b16 %v953
    %v1597 = vunpack.c.l.b16 %v954
    %v1598 = vunpack.c.h.b16 %v954
    %v1599 = vunpack.c.l.b16 %v955
    %v1600 = vunpack.c.h.b16 %v955
    %v1601 = vunpack.c.l.b16 %v956
    %v1602 = vunpack.c.h.b16 %v956
    %v1603 = vunpack.c.l.b16 %v957
    %v1604 = vunpack.c.h.b16 %v957
    %v1605 = vunpack.c.l.b16 %v958
    %v1606 = vunpack.c.h.b16 %v958
    %v1607 = vunpack.c.l.b16 %v959
    %v1608 = vunpack.c.h.b16 %v959
    %v1609 = vunpack.c.l.b16 %v960
    %v1610 = vunpack.c.h.b16 %v960
    %v1611 = vunpack.c.l.b16 %v961
    %v1612 = vunpack.c.h.b16 %v961
    %v1613 = vunpack.c.l.b16 %v962
    %v1614 = vunpack.c.h.b16 %v962
    %v1615 = vunpack.c.l.b16 %v963
    %v1616 = vunpack.c.h.b16 %v963
    %v1617 = vunpack.c.l.b16 %v964
    %v1618 = vunpack.c.h.b16 %v964
    %v1619 = vunpack.c.l.b16 %v965
    %v1620 = vunpack.c.h.b16 %v965
    %v1621 = vunpack.c.l.b16 %v966
    %v1622 = vunpack.c.h.b16 %v966
    %v1623 = vunpack.c.l.b16 %v967
    %v1624 = vunpack.c.h.b16 %v967
    %v1625 = vunpack.c.l.b16 %v968
    %v1626 = vunpack.c.h.b16 %v968
    %v1627 = vunpack.c.l.b16 %v969
    %v1628 = vunpack.c.h.b16 %v969
    %v1629 = vunpack.c.l.b16 %v970
    %v1630 = vunpack.c.h.b16 %v970
    %v1631 = vunpack.c.l.b16 %v971
    %v1632 = vunpack.c.h.b16 %v971
    %v1633 = vunpack.c.l.b16 %v972
    %v1634 = vunpack.c.h.b16 %v972
    %v1635 = vunpack.c.l.b16 %v973
    %v1636 = vunpack.c.h.b16 %v973
    %v1637 = vunpack.c.l.b16 %v974
    %v1638 = vunpack.c.h.b16 %v974
    %v1639 = vunpack.c.l.b16 %v975
    %v1640 = vunpack.c.h.b16 %v975
    %v1641 = vunpack.c.l.b16 %v976
    %v1642 = vunpack.c.h.b16 %v976
    %v1643 = vunpack.c.l.b16 %v977
    %v1644 = vunpack.c.h.b16 %v977
    %v1645 = vunpack.c.l.b16 %v978
    %v1646 = vunpack.c.h.b16 %v978
    %v1647 = vunpack.c.l.b16 %v979
    %v1648 = vunpack.c.h.b16 %v979
    %v1649 = vunpack.c.l.b16 %v980
    %v1650 = vunpack.c.h.b16 %v980
    %v1651 = vunpack.c.l.b16 %v981
    %v1652 = vunpack.c.h.b16 %v981
    %v1653 = vunpack.c.l.b16 %v982
    %v1654 = vunpack.c.h.b16 %v982
    %v1655 = vunpack.c.l.b16 %v983
    %v1656 = vunpack.c.h.b16 %v983
    %v1657 = vunpack.c.l.b16 %v984
    %v1658 = vunpack.c.h.b16 %v984
    %v1659 = vunpack.c.l.b16 %v985
    %v1660 = vunpack.c.h.b16 %v985
    %v1661 = vunpack.c.l.b16 %v986
    %v1662 = vunpack.c.h.b16 %v986
    %v1663 = vunpack.c.l.b16 %v987
    %v1664 = vunpack.c.h.b16 %v987
    %v1665 = vunpack.c.l.b16 %v988
    %v1666 = vunpack.c.h.b16 %v988
    %v1667 = vunpack.c.l.b16 %v989
    %v1668 = vunpack.c.h.b16 %v989
    %v1669 = vunpack.c.l.b16 %v990
    %v1670 = vunpack.c.h.b16 %v990
    %v1671 = vunpack.c.l.b16 %v991
    %v1672 = vunpack.c.h.b16 %v991
    %v1673 = vunpack.c.l.b16 %v992
    %v1674 = vunpack.c.h.b16 %v992
    %v1675 = vunpack.c.l.b16 %v993
    %v1676 = vunpack.c.h.b16 %v993
    %v1677 = vunpack.c.l.b16 %v994
    %v1678 = vunpack.c.h.b16 %v994
    %v1679 = vunpack.c.l.b16 %v995
    %v1680 = vunpack.c.h.b16 %v995
    %v1681 = vunpack.c.l.b16 %v996
    %v1682 = vunpack.c.h.b16 %v996
    %v1683 = vunpack.c.l.b16 %v997
    %v1684 = vunpack.c.h.b16 %v997
    %v1685 = vunpack.c.l.b16 %v998
    %v1686 = vunpack.c.h.b16 %v998
    %v1687 = vunpack.c.l.b16 %v999
    %v1688 = vunpack.c.h.b16 %v999
    %v1689 = vunpack.c.l.b16 %v1000
    %v1690 = vunpack.c.h.b16 %v1000
    %v1691 = vunpack.c.l.b16 %v1001
    %v1692 = vunpack.c.h.b16 %v1001
    %v1693 = vunpack.c.l.b16 %v1002
    %v1694 = vunpack.c.h.b16 %v1002
    %v1695 = vunpack.c.l.b16 %v1003
    %v1696 = vunpack.c.h.b16 %v1003
    %v1697 = vunpack.c.l.b16 %v1004
    %v1698 = vunpack.c.h.b16 %v1004
    %v1699 = vunpack.c.l.b16 %v1005
    %v1700 = vunpack.c.h.b16 %v1005
    %v1701 = vunpack.c.l.b16 %v1006
    %v1702 = vunpack.c.h.b16 %v1006
    %v1703 = vunpack.c.l.b16 %v1007
    %v1704 = vunpack.c.h.b16 %v1007
    %v1705 = vunpack.c.l.b16 %v1008
    %v1706 = vunpack.c.h.b16 %v1008
    %v1707 = vunpack.c.l.b16 %v1009
    %v1708 = vunpack.c.h.b16 %v1009
    %v1709 = vunpack.c.l.b16 %v1010
    %v1710 = vunpack.c.h.b16 %v1010
    %v1711 = vunpack.c.l.b16 %v1011
    %v1712 = vunpack.c.h.b16 %v1011
    %v1713 = vunpack.c.l.b16 %v1012
    %v1714 = vunpack.c.h.b16 %v1012
    %v1715 = vunpack.c.l.b16 %v1013
    %v1716 = vunpack.c.h.b16 %v1013
    %v1717 = vunpack.c.l.b16 %v1014
    %v1718 = vunpack.c.h.b16 %v1014
    %v1719 = vunpack.c.l.b16 %v1015
    %v1720 = vunpack.c.h.b16 %v1015
    %v1721 = vunpack.c.l.b16 %v1016
    %v1722 = vunpack.c.h.b16 %v1016
    %v1723 = vunpack.c.l.b16 %v1017
    %v1724 = vunpack.c.h.b16 %v1017
    %v1725 = vunpack.c.l.b16 %v1018
    %v1726 = vunpack.c.h.b16 %v1018
    %v1727 = vunpack.c.l.b16 %v1019
    %v1728 = vunpack.c.h.b16 %v1019
    %v1729 = vunpack.c.l.b16 %v1020
    %v1730 = vunpack.c.h.b16 %v1020
    %v1731 = vunpack.c.l.b16 %v1021
    %v1732 = vunpack.c.h.b16 %v1021
    %v1733 = vunpack.c.l.b16 %v1022
    %v1734 = vunpack.c.h.b16 %v1022
    %v1735 = vunpack.c.l.b16 %v1023
    %v1736 = vunpack.c.h.b16 %v1023
    %v1737 = vunpack.c.l.b16 %v1024
    %v1738 = vunpack.c.h.b16 %v1024
    %v1739 = vunpack.c.l.b16 %v1025
    %v1740 = vunpack.c.h.b16 %v1025
    %v1741 = vunpack.c.l.b16 %v1026
    %v1742 = vunpack.c.h.b16 %v1026
    %v1743 = vunpack.c.l.b16 %v1027
    %v1744 = vunpack.c.h.b16 %v1027
    %v1745 = vunpack.c.l.b16 %v1028
    %v1746 = vunpack.c.h.b16 %v1028
    %v1747 = vunpack.c.l.b16 %v1029
    %v1748 = vunpack.c.h.b16 %v1029
    %v1749 = vunpack.c.l.b16 %v1030
    %v1750 = vunpack.c.h.b16 %v1030
    %v1751 = vunpack.c.l.b16 %v1031
    %v1752 = vunpack.c.h.b16 %v1031
    %v1753 = vunpack.c.l.b16 %v1032
    %v1754 = vunpack.c.h.b16 %v1032
    %v1755 = vunpack.c.l.b16 %v1033
    %v1756 = vunpack.c.h.b16 %v1033
    %v1757 = vunpack.c.l.b16 %v1034
    %v1758 = vunpack.c.h.b16 %v1034
    %v1759 = vunpack.c.l.b16 %v1035
    %v1760 = vunpack.c.h.b16 %v1035
    %v1761 = vunpack.c.l.b16 %v1036
    %v1762 = vunpack.c.h.b16 %v1036
    %v1763 = vunpack.c.l.b16 %v1037
    %v1764 = vunpack.c.h.b16 %v1037
    %v1765 = vunpack.c.l.b16 %v1038
    %v1766 = vunpack.c.h.b16 %v1038
    %v1767 = vunpack.c.l.b16 %v1039
    %v1768 = vunpack.c.h.b16 %v1039
    %v1769 = vunpack.c.l.b16 %v1040
    %v1770 = vunpack.c.h.b16 %v1040
    %v1771 = vunpack.c.l.b16 %v1041
    %v1772 = vunpack.c.h.b16 %v1041
    %v1773 = vunpack.c.l.b16 %v1042
    %v1774 = vunpack.c.h.b16 %v1042
    %v1775 = vunpack.c.l.b16 %v1043
    %v1776 = vunpack.c.h.b16 %v1043
    %v1777 = vunpack.c.l.b16 %v1044
    %v1778 = vunpack.c.h.b16 %v1044
    %v1779 = vunpack.c.l.b16 %v1045
    %v1780 = vunpack.c.h.b16 %v1045
    %v1781 = vunpack.c.l.b16 %v1046
    %v1782 = vunpack.c.h.b16 %v1046
    %v1783 = vunpack.c.l.b16 %v1047
    %v1784 = vunpack.c.h.b16 %v1047
    %v1785 = vunpack.c.l.b16 %v1048
    %v1786 = vunpack.c.h.b16 %v1048
    %v1787 = vunpack.c.l.b16 %v1049
    %v1788 = vunpack.c.h.b16 %v1049
    %v1789 = vunpack.c.l.b16 %v1050
    %v1790 = vunpack.c.h.b16 %v1050
    %v1791 = vunpack.c.l.b16 %v1051
    %v1792 = vunpack.c.h.b16 %v1051
    %v1793 = vunpack.c.l.b16 %v1052
    %v1794 = vunpack.c.h.b16 %v1052
    %v1795 = vunpack.c.l.b16 %v1053
    %v1796 = vunpack.c.h.b16 %v1053
    %v1797 = vunpack.c.l.b16 %v1054
    %v1798 = vunpack.c.h.b16 %v1054
    %v1799 = vunpack.c.l.b16 %v1055
    %v1800 = vunpack.c.h.b16 %v1055
    %v1801 = vunpack.c.l.b16 %v1056
    %v1802 = vunpack.c.h.b16 %v1056
    %v1803 = vunpack.c.l.b16 %v1057
    %v1804 = vunpack.c.h.b16 %v1057
    %v1805 = vunpack.c.l.b16 %v1058
    %v1806 = vunpack.c.h.b16 %v1058
    %v1807 = vunpack.c.l.b16 %v1059
    %v1808 = vunpack.c.h.b16 %v1059
    %v1809 = vunpack.c.l.b16 %v1060
    %v1810 = vunpack.c.h.b16 %v1060
    %v1811 = vunpack.c.l.b16 %v1061
    %v1812 = vunpack.c.h.b16 %v1061
    %v1813 = vunpack.c.l.b16 %v1062
    %v1814 = vunpack.c.h.b16 %v1062
    %v1815 = vunpack.c.l.b16 %v1063
    %v1816 = vunpack.c.h.b16 %v1063
    %v1817 = vunpack.c.l.b16 %v1064
    %v1818 = vunpack.c.h.b16 %v1064
    %v1819 = vunpack.c.l.b16 %v1065
    %v1820 = vunpack.c.h.b16 %v1065
    %v1821 = vunpack.c.l.b16 %v1066
    %v1822 = vunpack.c.h.b16 %v1066
    %v1823 = vunpack.c.l.b16 %v1067
    %v1824 = vunpack.c.h.b16 %v1067
    %v1825 = vunpack.c.l.b16 %v1068
    %v1826 = vunpack.c.h.b16 %v1068
    %v1827 = vunpack.c.l.b16 %v1069
    %v1828 = vunpack.c.h.b16 %v1069
    %v1829 = vunpack.c.l.b16 %v1070
    %v1830 = vunpack.c.h.b16 %v1070
    %v1831 = vunpack.c.l.b16 %v1071
    %v1832 = vunpack.c.h.b16 %v1071
    %v1833 = vunpack.c.l.b16 %v1072
    %v1834 = vunpack.c.h.b16 %v1072
    %v1835 = vunpack.c.l.b16 %v1073
    %v1836 = vunpack.c.h.b16 %v1073
    %v1837 = vunpack.c.l.b16 %v1074
    %v1838 = vunpack.c.h.b16 %v1074
    %v1839 = vunpack.c.l.b16 %v1075
    %v1840 = vunpack.c.h.b16 %v1075
    %v1841 = vunpack.c.l.b16 %v1076
    %v1842 = vunpack.c.h.b16 %v1076
    %v1843 = vunpack.c.l.b16 %v1077
    %v1844 = vunpack.c.h.b16 %v1077
    %v1845 = vunpack.c.l.b16 %v1078
    %v1846 = vunpack.c.h.b16 %v1078
    %v1847 = vunpack.c.l.b16 %v1079
    %v1848 = vunpack.c.h.b16 %v1079
    %v1849 = vunpack.c.l.b16 %v1080
    %v1850 = vunpack.c.h.b16 %v1080
    %v1851 = vunpack.c.l.b16 %v1081
    %v1852 = vunpack.c.h.b16 %v1081
    %v1853 = vunpack.c.l.b16 %v1082
    %v1854 = vunpack.c.h.b16 %v1082
    %v1855 = vunpack.c.l.b16 %v1083
    %v1856 = vunpack.c.h.b16 %v1083
    %v1857 = vunpack.c.l.b16 %v1084
    %v1858 = vunpack.c.h.b16 %v1084
    %v1859 = vunpack.c.l.b16 %v1085
    %v1860 = vunpack.c.h.b16 %v1085
    %v1861 = vunpack.c.l.b16 %v1086
    %v1862 = vunpack.c.h.b16 %v1086
    %v1863 = vunpack.c.l.b16 %v1087
    %v1864 = vunpack.c.h.b16 %v1087
    %v1865 = vunpack.c.l.b16 %v1088
    %v1866 = vunpack.c.h.b16 %v1088
    %v1867 = vunpack.c.l.b16 %v1089
    %v1868 = vunpack.c.h.b16 %v1089
    %v1869 = vunpack.c.l.b16 %v1090
    %v1870 = vunpack.c.h.b16 %v1090
    %v1871 = vpack.c.b16 %v1361, %v1359
    %v1872 = vpack.c.b16 %v1362, %v1360
    %v1873 = vpack.c.b16 %v1365, %v1363
    %v1874 = vpack.c.b16 %v1366, %v1364
    %v1875 = vpack.c.b16 %v1369, %v1367
    %v1876 = vpack.c.b16 %v1370, %v1368
    %v1877 = vpack.c.b16 %v1373, %v1371
    %v1878 = vpack.c.b16 %v1374, %v1372
    %v1879 = vpack.c.b16 %v1377, %v1375
    %v1880 = vpack.c.b16 %v1378, %v1376
    %v1881 = vpack.c.b16 %v1381, %v1379
    %v1882 = vpack.c.b16 %v1382, %v1380
    %v1883 = vpack.c.b16 %v1385, %v1383
    %v1884 = vpack.c.b16 %v1386, %v1384
    %v1885 = vpack.c.b16 %v1389, %v1387
    %v1886 = vpack.c.b16 %v1390, %v1388
    %v1887 = vpack.c.b16 %v1393, %v1391
    %v1888 = vpack.c.b16 %v1394, %v1392
    %v1889 = vpack.c.b16 %v1397, %v1395
    %v1890 = vpack.c.b16 %v1398, %v1396
    %v1891 = vpack.c.b16 %v1401, %v1399
    %v1892 = vpack.c.b16 %v1402, %v1400
    %v1893 = vpack.c.b16 %v1405, %v1403
    %v1894 = vpack.c.b16 %v1406, %v1404
    %v1895 = vpack.c.b16 %v1409, %v1407
    %v1896 = vpack.c.b16 %v1410, %v1408
    %v1897 = vpack.c.b16 %v1413, %v1411
    %v1898 = vpack.c.b16 %v1414, %v1412
    %v1899 = vpack.c.b16 %v1417, %v1415
    %v1900 = vpack.c.b16 %v1418, %v1416
    %v1901 = vpack.c.b16 %v1421, %v1419
    %v1902 = vpack.c.b16 %v1422, %v1420
    %v1903 = vpack.c.b16 %v1425, %v1423
    %v1904 = vpack.c.b16 %v1426, %v1424
    %v1905 = vpack.c.b16 %v1429, %v1427
    %v1906 = vpack.c.b16 %v1430, %v1428
    %v1907 = vpack.c.b16 %v1433, %v1431
    %v1908 = vpack.c.b16 %v1434, %v1432
    %v1909 = vpack.c.b16 %v1437, %v1435
    %v1910 = vpack.c.b16 %v1438, %v1436
    %v1911 = vpack.c.b16 %v1441, %v1439
    %v1912 = vpack.c.b16 %v1442, %v1440
    %v1913 = vpack.c.b16 %v1445, %v1443
    %v1914 = vpack.c.b16 %v1446, %v1444
    %v1915 = vpack.c.b16 %v1449, %v1447
    %v1916 = vpack.c.b16 %v1450, %v1448
    %v1917 = vpack.c.b16 %v1453, %v1451
    %v1918 = vpack.c.b16 %v1454, %v1452
    %v1919 = vpack.c.b16 %v1457, %v1455
    %v1920 = vpack.c.b16 %v1458, %v1456
    %v1921 = vpack.c.b16 %v1461, %v1459
    %v1922 = vpack.c.b16 %v1462, %v1460
    %v1923 = vpack.c.b16 %v1465, %v1463
    %v1924 = vpack.c.b16 %v1466, %v1464
    %v1925 = vpack.c.b16 %v1469, %v1467
    %v1926 = vpack.c.b16 %v1470, %v1468
    %v1927 = vpack.c.b16 %v1473, %v1471
    %v1928 = vpack.c.b16 %v1474, %v1472
    %v1929 = vpack.c.b16 %v1477, %v1475
    %v1930 = vpack.c.b16 %v1478, %v1476
    %v1931 = vpack.c.b16 %v1481, %v1479
    %v1932 = vpack.c.b16 %v1482, %v1480
    %v1933 = vpack.c.b16 %v1485, %v1483
    %v1934 = vpack.c.b16 %v1486, %v1484
    %v1935 = vpack.c.b16 %v1489, %v1487
    %v1936 = vpack.c.b16 %v1490, %v1488
    %v1937 = vpack.c.b16 %v1493, %v1491
    %v1938 = vpack.c.b16 %v1494, %v1492
    %v1939 = vpack.c.b16 %v1497, %v1495
    %v1940 = vpack.c.b16 %v1498, %v1496
    %v1941 = vpack.c.b16 %v1501, %v1499
    %v1942 = vpack.c.b16 %v1502, %v1500
    %v1943 = vpack.c.b16 %v1505, %v1503
    %v1944 = vpack.c.b16 %v1506, %v1504
    %v1945 = vpack.c.b16 %v1509, %v1507
    %v1946 = vpack.c.b16 %v1510, %v1508
    %v1947 = vpack.c.b16 %v1513, %v1511
    %v1948 = vpack.c.b16 %v1514, %v1512
    %v1949 = vpack.c.b16 %v1517, %v1515
    %v1950 = vpack.c.b16 %v1518, %v1516
    %v1951 = vpack.c.b16 %v1521, %v1519
    %v1952 = vpack.c.b16 %v1522, %v1520
    %v1953 = vpack.c.b16 %v1525, %v1523
    %v1954 = vpack.c.b16 %v1526, %v1524
    %v1955 = vpack.c.b16 %v1529, %v1527
    %v1956 = vpack.c.b16 %v1530, %v1528
    %v1957 = vpack.c.b16 %v1533, %v1531
    %v1958 = vpack.c.b16 %v1534, %v1532
    %v1959 = vpack.c.b16 %v1537, %v1535
    %v1960 = vpack.c.b16 %v1538, %v1536
    %v1961 = vpack.c.b16 %v1541, %v1539
    %v1962 = vpack.c.b16 %v1542, %v1540
    %v1963 = vpack.c.b16 %v1545, %v1543
    %v1964 = vpack.c.b16 %v1546, %v1544
    %v1965 = vpack.c.b16 %v1549, %v1547
    %v1966 = vpack.c.b16 %v1550, %v1548
    %v1967 = vpack.c.b16 %v1553, %v1551
    %v1968 = vpack.c.b16 %v1554, %v1552
    %v1969 = vpack.c.b16 %v1557, %v1555
    %v1970 = vpack.c.b16 %v1558, %v1556
    %v1971 = vpack.c.b16 %v1561, %v1559
    %v1972 = vpack.c.b16 %v1562, %v1560
    %v1973 = vpack.c.b16 %v1565, %v1563
    %v1974 = vpack.c.b16 %v1566, %v1564
    %v1975 = vpack.c.b16 %v1569, %v1567
    %v1976 = vpack.c.b16 %v1570, %v1568
    %v1977 = vpack.c.b16 %v1573, %v1571
    %v1978 = vpack.c.b16 %v1574, %v1572
    %v1979 = vpack.c.b16 %v1577, %v1575
    %v1980 = vpack.c.b16 %v1578, %v1576
    %v1981 = vpack.c.b16 %v1581, %v1579
    %v1982 = vpack.c.b16 %v1582, %v1580
    %v1983 = vpack.c.b16 %v1585, %v1583
    %v1984 = vpack.c.b16 %v1586, %v1584
    %v1985 = vpack.c.b16 %v1589, %v1587
    %v1986 = vpack.c.b16 %v1590, %v1588
    %v1987 = vpack.c.b16 %v1593, %v1591
    %v1988 = vpack.c.b16 %v1594, %v1592
    %v1989 = vpack.c.b16 %v1597, %v1595
    %v1990 = vpack.c.b16 %v1598, %v1596
    %v1991 = vpack.c.b16 %v1601, %v1599
    %v1992 = vpack.c.b16 %v1602, %v1600
    %v1993 = vpack.c.b16 %v1605, %v1603
    %v1994 = vpack.c.b16 %v1606, %v1604
    %v1995 = vpack.c.b16 %v1609, %v1607
    %v1996 = vpack.c.b16 %v1610, %v1608
    %v1997 = vpack.c.b16 %v1613, %v1611
    %v1998 = vpack.c.b16 %v1614, %v1612
    %v1999 = vpack.c.b16 %v1617, %v1615
    %v2000 = vpack.c.b16 %v1618, %v1616
    %v2001 = vpack.c.b16 %v1621, %v1619
    %v2002 = vpack.c.b16 %v1622, %v1620
    %v2003 = vpack.c.b16 %v1625, %v1623
    %v2004 = vpack.c.b16 %v1626, %v1624
    %v2005 = vpack.c.b16 %v1629, %v1627
    %v2006 = vpack.c.b16 %v1630, %v1628
    %v2007 = vpack.c.b16 %v1633, %v1631
    %v2008 = vpack.c.b16 %v1634, %v1632
    %v2009 = vpack.c.b16 %v1637, %v1635
    %v2010 = vpack.c.b16 %v1638, %v1636
    %v2011 = vpack.c.b16 %v1641, %v1639
    %v2012 = vpack.c.b16 %v1642, %v1640
    %v2013 = vpack.c.b16 %v1645, %v1643
    %v2014 = vpack.c.b16 %v1646, %v1644
    %v2015 = vpack.c.b16 %v1649, %v1647
    %v2016 = vpack.c.b16 %v1650, %v1648
    %v2017 = vpack.c.b16 %v1653, %v1651
    %v2018 = vpack.c.b16 %v1654, %v1652
    %v2019 = vpack.c.b16 %v1657, %v1655
    %v2020 = vpack.c.b16 %v1658, %v1656
    %v2021 = vpack.c.b16 %v1661, %v1659
    %v2022 = vpack.c.b16 %v1662, %v1660
    %v2023 = vpack.c.b16 %v1665, %v1663
    %v2024 = vpack.c.b16 %v1666, %v1664
    %v2025 = vpack.c.b16 %v1669, %v1667
    %v2026 = vpack.c.b16 %v1670, %v1668
    %v2027 = vpack.c.b16 %v1673, %v1671
    %v2028 = vpack.c.b16 %v1674, %v1672
    %v2029 = vpack.c.b16 %v1677, %v1675
    %v2030 = vpack.c.b16 %v1678, %v1676
    %v2031 = vpack.c.b16 %v1681, %v1679
    %v2032 = vpack.c.b16 %v1682, %v1680
    %v2033 = vpack.c.b16 %v1685, %v1683
    %v2034 = vpack.c.b16 %v1686, %v1684
    %v2035 = vpack.c.b16 %v1689, %v1687
    %v2036 = vpack.c.b16 %v1690, %v1688
    %v2037 = vpack.c.b16 %v1693, %v1691
    %v2038 = vpack.c.b16 %v1694, %v1692
    %v2039 = vpack.c.b16 %v1697, %v1695
    %v2040 = vpack.c.b16 %v1698, %v1696
    %v2041 = vpack.c.b16 %v1701, %v1699
    %v2042 = vpack.c.b16 %v1702, %v1700
    %v2043 = vpack.c.b16 %v1705, %v1703
    %v2044 = vpack.c.b16 %v1706, %v1704
    %v2045 = vpack.c.b16 %v1709, %v1707
    %v2046 = vpack.c.b16 %v1710, %v1708
    %v2047 = vpack.c.b16 %v1713, %v1711
    %v2048 = vpack.c.b16 %v1714, %v1712
    %v2049 = vpack.c.b16 %v1717, %v1715
    %v2050 = vpack.c.b16 %v1718, %v1716
    %v2051 = vpack.c.b16 %v1721, %v1719
    %v2052 = vpack.c.b16 %v1722, %v1720
    %v2053 = vpack.c.b16 %v1725, %v1723
    %v2054 = vpack.c.b16 %v1726, %v1724
    %v2055 = vpack.c.b16 %v1729, %v1727
    %v2056 = vpack.c.b16 %v1730, %v1728
    %v2057 = vpack.c.b16 %v1733, %v1731
    %v2058 = vpack.c.b16 %v1734, %v1732
    %v2059 = vpack.c.b16 %v1737, %v1735
    %v2060 = vpack.c.b16 %v1738, %v1736
    %v2061 = vpack.c.b16 %v1741, %v1739
    %v2062 = vpack.c.b16 %v1742, %v1740
    %v2063 = vpack.c.b16 %v1745, %v1743
    %v2064 = vpack.c.b16 %v1746, %v1744
    %v2065 = vpack.c.b16 %v1749, %v1747
    %v2066 = vpack.c.b16 %v1750, %v1748
    %v2067 = vpack.c.b16 %v1753, %v1751
    %v2068 = vpack.c.b16 %v1754, %v1752
    %v2069 = vpack.c.b16 %v1757, %v1755
    %v2070 = vpack.c.b16 %v1758, %v1756
    %v2071 = vpack.c.b16 %v1761, %v1759
    %v2072 = vpack.c.b16 %v1762, %v1760
    %v2073 = vpack.c.b16 %v1765, %v1763
    %v2074 = vpack.c.b16 %v1766, %v1764
    %v2075 = vpack.c.b16 %v1769, %v1767
    %v2076 = vpack.c.b16 %v1770, %v1768
    %v2077 = vpack.c.b16 %v1773, %v1771
    %v2078 = vpack.c.b16 %v1774, %v1772
    %v2079 = vpack.c.b16 %v1777, %v1775
    %v2080 = vpack.c.b16 %v1778, %v1776
    %v2081 = vpack.c.b16 %v1781, %v1779
    %v2082 = vpack.c.b16 %v1782, %v1780
    %v2083 = vpack.c.b16 %v1785, %v1783
    %v2084 = vpack.c.b16 %v1786, %v1784
    %v2085 = vpack.c.b16 %v1789, %v1787
    %v2086 = vpack.c.b16 %v1790, %v1788
    %v2087 = vpack.c.b16 %v1793, %v1791
    %v2088 = vpack.c.b16 %v1794, %v1792
    %v2089 = vpack.c.b16 %v1797, %v1795
    %v2090 = vpack.c.b16 %v1798, %v1796
    %v2091 = vpack.c.b16 %v1801, %v1799
    %v2092 = vpack.c.b16 %v1802, %v1800
    %v2093 = vpack.c.b16 %v1805, %v1803
    %v2094 = vpack.c.b16 %v1806, %v1804
    %v2095 = vpack.c.b16 %v1809, %v1807
    %v2096 = vpack.c.b16 %v1810, %v1808
    %v2097 = vpack.c.b16 %v1813, %v1811
    %v2098 = vpack.c.b16 %v1814, %v1812
    %v2099 = vpack.c.b16 %v1817, %v1815
    %v2100 = vpack.c.b16 %v1818, %v1816
    %v2101 = vpack.c.b16 %v1821, %v1819
    %v2102 = vpack.c.b16 %v1822, %v1820
    %v2103 = vpack.c.b16 %v1825, %v1823
    %v2104 = vpack.c.b16 %v1826, %v1824
    %v2105 = vpack.c.b16 %v1829, %v1827
    %v2106 = vpack.c.b16 %v1830, %v1828
    %v2107 = vpack.c.b16 %v1833, %v1831
    %v2108 = vpack.c.b16 %v1834, %v1832
    %v2109 = vpack.c.b16 %v1837, %v1835
    %v2110 = vpack.c.b16 %v1838, %v1836
    %v2111 = vpack.c.b16 %v1841, %v1839
    %v2112 = vpack.c.b16 %v1842, %v1840
    %v2113 = vpack.c.b16 %v1845, %v1843
    %v2114 = vpack.c.b16 %v1846, %v1844
    %v2115 = vpack.c.b16 %v1849, %v1847
    %v2116 = vpack.c.b16 %v1850, %v1848
    %v2117 = vpack.c.b16 %v1853, %v1851
    %v2118 = vpack.c.b16 %v1854, %v1852
    %v2119 = vpack.c.b16 %v1857, %v1855
    %v2120 = vpack.c.b16 %v1858, %v1856
    %v2121 = vpack.c.b16 %v1861, %v1859
    %v2122 = vpack.c.b16 %v1862, %v1860
    %v2123 = vpack.c.b16 %v1865, %v1863
    %v2124 = vpack.c.b16 %v1866, %v1864
    %v2125 = vpack.c.b16 %v1869, %v1867
    %v2126 = vpack.c.b16 %v1870, %v1868
    %2383 = vmatprep.subr.bf16.mxu0 %v1886
    %2384 = vmatpush1.bf16.msra.mxu0 %v1885
    %2385 = vmatprep.subr.bf16.mxu0 %v1884
    %2386 = vmatpush1.bf16.msra.mxu0 %v1883
    %2387 = vmatprep.subr.bf16.mxu0 %v1882
    %2388 = vmatpush1.bf16.msra.mxu0 %v1881
    %2389 = vmatprep.subr.bf16.mxu0 %v1880
    %2390 = vmatpush1.bf16.msra.mxu0 %v1879
    %2391 = vmatprep.subr.bf16.mxu0 %v1878
    %2392 = vmatpush1.bf16.msra.mxu0 %v1877
    %2393 = vmatprep.subr.bf16.mxu0 %v1876
    %2394 = vmatpush1.bf16.msra.mxu0 %v1875
    %2395 = vmatprep.subr.bf16.mxu0 %v1874
    %2396 = vmatpush1.bf16.msra.mxu0 %v1873
    %2397 = vmatprep.subr.bf16.mxu0 %v1872
    %2398 = vmatpush1.bf16.msra.mxu0 %v1871
    %2399 = vmatprep.subr.bf16.mxu0 %v1902
    %2400 = vmatpush2.bf16.msra.mxu0 %v1901
    %2401 = vmatprep.subr.bf16.mxu0 %v1900
    %2402 = vmatpush2.bf16.msra.mxu0 %v1899
    %2403 = vmatprep.subr.bf16.mxu0 %v1898
    %2404 = vmatpush2.bf16.msra.mxu0 %v1897
    %2405 = vmatprep.subr.bf16.mxu0 %v1896
    %2406 = vmatpush2.bf16.msra.mxu0 %v1895
    %2407 = vmatprep.subr.bf16.mxu0 %v1894
    %2408 = vmatpush2.bf16.msra.mxu0 %v1893
    %2409 = vmatprep.subr.bf16.mxu0 %v1892
    %2410 = vmatpush2.bf16.msra.mxu0 %v1891
    %2411 = vmatprep.subr.bf16.mxu0 %v1890
    %2412 = vmatpush2.bf16.msra.mxu0 %v1889
    %2413 = vmatprep.subr.bf16.mxu0 %v1888
    %2414 = vmatpush2.bf16.msra.mxu0 %v1887
    %2415 = vmatprep.mubr.bf16.mxu0 %v107
    %2416 = vmatmul.mubr.bf16.gmra.mxu0 %v106
    %v2417 = vpop.f32.mrf.mxu0
    %v2418 = vadd.f32 %v1096, %v2417
    %v2419 = vpop.f32.mrf.mxu0
    %v2420 = vadd.f32 %v1100, %v2419
    %v2421 = vpop.f32.mrf.mxu0
    %v2422 = vpop.f32.mrf.mxu0
    %2423 = vdwg.mxu0
    %2424 = vmatprep.subr.bf16.mxu0 %v1918
    %2425 = vmatpush1.bf16.msra.mxu0 %v1917
    %2426 = vmatprep.subr.bf16.mxu0 %v1916
    %2427 = vmatpush1.bf16.msra.mxu0 %v1915
    %2428 = vmatprep.subr.bf16.mxu0 %v1914
    %2429 = vmatpush1.bf16.msra.mxu0 %v1913
    %2430 = vmatprep.subr.bf16.mxu0 %v1912
    %2431 = vmatpush1.bf16.msra.mxu0 %v1911
    %2432 = vmatprep.subr.bf16.mxu0 %v1910
    %2433 = vmatpush1.bf16.msra.mxu0 %v1909
    %2434 = vmatprep.subr.bf16.mxu0 %v1908
    %2435 = vmatpush1.bf16.msra.mxu0 %v1907
    %2436 = vmatprep.subr.bf16.mxu0 %v1906
    %2437 = vmatpush1.bf16.msra.mxu0 %v1905
    %2438 = vmatprep.subr.bf16.mxu0 %v1904
    %2439 = vmatpush1.bf16.msra.mxu0 %v1903
    %2440 = vmatprep.subr.bf16.mxu0 %v1934
    %2441 = vmatpush2.bf16.msra.mxu0 %v1933
    %2442 = vmatprep.subr.bf16.mxu0 %v1932
    %2443 = vmatpush2.bf16.msra.mxu0 %v1931
    %2444 = vmatprep.subr.bf16.mxu0 %v1930
    %2445 = vmatpush2.bf16.msra.mxu0 %v1929
    %2446 = vmatprep.subr.bf16.mxu0 %v1928
    %2447 = vmatpush2.bf16.msra.mxu0 %v1927
    %2448 = vmatprep.subr.bf16.mxu0 %v1926
    %2449 = vmatpush2.bf16.msra.mxu0 %v1925
    %2450 = vmatprep.subr.bf16.mxu0 %v1924
    %2451 = vmatpush2.bf16.msra.mxu0 %v1923
    %2452 = vmatprep.subr.bf16.mxu0 %v1922
    %2453 = vmatpush2.bf16.msra.mxu0 %v1921
    %2454 = vmatprep.subr.bf16.mxu0 %v1920
    %2455 = vmatpush2.bf16.msra.mxu0 %v1919
    %2456 = vmatprep.mubr.bf16.mxu0 %v109
    %2457 = vmatmul.mubr.bf16.gmra.mxu0 %v108
    %v2458 = vpop.f32.mrf.mxu0
    %v2459 = vadd.f32 %v2418, %v2458
    %v2460 = vpop.f32.mrf.mxu0
    %v2461 = vadd.f32 %v2420, %v2460
    %v2462 = vpop.f32.mrf.mxu0
    %v2463 = vpop.f32.mrf.mxu0
    %2464 = vdwg.mxu0
    %2465 = vmatprep.subr.bf16.mxu0 %v1950
    %2466 = vmatpush1.bf16.msra.mxu0 %v1949
    %2467 = vmatprep.subr.bf16.mxu0 %v1948
    %2468 = vmatpush1.bf16.msra.mxu0 %v1947
    %2469 = vmatprep.subr.bf16.mxu0 %v1946
    %2470 = vmatpush1.bf16.msra.mxu0 %v1945
    %2471 = vmatprep.subr.bf16.mxu0 %v1944
    %2472 = vmatpush1.bf16.msra.mxu0 %v1943
    %2473 = vmatprep.subr.bf16.mxu0 %v1942
    %2474 = vmatpush1.bf16.msra.mxu0 %v1941
    %2475 = vmatprep.subr.bf16.mxu0 %v1940
    %2476 = vmatpush1.bf16.msra.mxu0 %v1939
    %2477 = vmatprep.subr.bf16.mxu0 %v1938
    %2478 = vmatpush1.bf16.msra.mxu0 %v1937
    %2479 = vmatprep.subr.bf16.mxu0 %v1936
    %2480 = vmatpush1.bf16.msra.mxu0 %v1935
    %2481 = vmatprep.subr.bf16.mxu0 %v1966
    %2482 = vmatpush2.bf16.msra.mxu0 %v1965
    %2483 = vmatprep.subr.bf16.mxu0 %v1964
    %2484 = vmatpush2.bf16.msra.mxu0 %v1963
    %2485 = vmatprep.subr.bf16.mxu0 %v1962
    %2486 = vmatpush2.bf16.msra.mxu0 %v1961
    %2487 = vmatprep.subr.bf16.mxu0 %v1960
    %2488 = vmatpush2.bf16.msra.mxu0 %v1959
    %2489 = vmatprep.subr.bf16.mxu0 %v1958
    %2490 = vmatpush2.bf16.msra.mxu0 %v1957
    %2491 = vmatprep.subr.bf16.mxu0 %v1956
    %2492 = vmatpush2.bf16.msra.mxu0 %v1955
    %2493 = vmatprep.subr.bf16.mxu0 %v1954
    %2494 = vmatpush2.bf16.msra.mxu0 %v1953
    %2495 = vmatprep.subr.bf16.mxu0 %v1952
    %2496 = vmatpush2.bf16.msra.mxu0 %v1951
    %2497 = vmatprep.mubr.bf16.mxu0 %v111
    %2498 = vmatmul.mubr.bf16.gmra.mxu0 %v110
    %v2499 = vpop.f32.mrf.mxu0
    %v2500 = vadd.f32 %v2459, %v2499
    %v2501 = vpop.f32.mrf.mxu0
    %v2502 = vadd.f32 %v2461, %v2501
    %v2503 = vpop.f32.mrf.mxu0
    %v2504 = vpop.f32.mrf.mxu0
    %2505 = vdwg.mxu0
    %2506 = vmatprep.subr.bf16.mxu0 %v1982
    %2507 = vmatpush1.bf16.msra.mxu0 %v1981
    %2508 = vmatprep.subr.bf16.mxu0 %v1980
    %2509 = vmatpush1.bf16.msra.mxu0 %v1979
    %2510 = vmatprep.subr.bf16.mxu0 %v1978
    %2511 = vmatpush1.bf16.msra.mxu0 %v1977
    %2512 = vmatprep.subr.bf16.mxu0 %v1976
    %2513 = vmatpush1.bf16.msra.mxu0 %v1975
    %2514 = vmatprep.subr.bf16.mxu0 %v1974
    %2515 = vmatpush1.bf16.msra.mxu0 %v1973
    %2516 = vmatprep.subr.bf16.mxu0 %v1972
    %2517 = vmatpush1.bf16.msra.mxu0 %v1971
    %2518 = vmatprep.subr.bf16.mxu0 %v1970
    %2519 = vmatpush1.bf16.msra.mxu0 %v1969
    %2520 = vmatprep.subr.bf16.mxu0 %v1968
    %2521 = vmatpush1.bf16.msra.mxu0 %v1967
    %2522 = vmatprep.subr.bf16.mxu0 %v1998
    %2523 = vmatpush2.bf16.msra.mxu0 %v1997
    %2524 = vmatprep.subr.bf16.mxu0 %v1996
    %2525 = vmatpush2.bf16.msra.mxu0 %v1995
    %2526 = vmatprep.subr.bf16.mxu0 %v1994
    %2527 = vmatpush2.bf16.msra.mxu0 %v1993
    %2528 = vmatprep.subr.bf16.mxu0 %v1992
    %2529 = vmatpush2.bf16.msra.mxu0 %v1991
    %2530 = vmatprep.subr.bf16.mxu0 %v1990
    %2531 = vmatpush2.bf16.msra.mxu0 %v1989
    %2532 = vmatprep.subr.bf16.mxu0 %v1988
    %2533 = vmatpush2.bf16.msra.mxu0 %v1987
    %2534 = vmatprep.subr.bf16.mxu0 %v1986
    %2535 = vmatpush2.bf16.msra.mxu0 %v1985
    %2536 = vmatprep.subr.bf16.mxu0 %v1984
    %2537 = vmatpush2.bf16.msra.mxu0 %v1983
    %2538 = vmatprep.mubr.bf16.mxu0 %v113
    %2539 = vmatmul.mubr.bf16.gmra.mxu0 %v112
    %v2540 = vpop.f32.mrf.mxu0
    %v2541 = vadd.f32 %v2500, %v2540
    %v2542 = vpop.f32.mrf.mxu0
    %v2543 = vadd.f32 %v2502, %v2542
    %v2544 = vpop.f32.mrf.mxu0
    %v2545 = vpop.f32.mrf.mxu0
    %2546 = vdwg.mxu0
    %2547 = vmatprep.subr.bf16.mxu0 %v2014
    %2548 = vmatpush1.bf16.msra.mxu0 %v2013
    %2549 = vmatprep.subr.bf16.mxu0 %v2012
    %2550 = vmatpush1.bf16.msra.mxu0 %v2011
    %2551 = vmatprep.subr.bf16.mxu0 %v2010
    %2552 = vmatpush1.bf16.msra.mxu0 %v2009
    %2553 = vmatprep.subr.bf16.mxu0 %v2008
    %2554 = vmatpush1.bf16.msra.mxu0 %v2007
    %2555 = vmatprep.subr.bf16.mxu0 %v2006
    %2556 = vmatpush1.bf16.msra.mxu0 %v2005
    %2557 = vmatprep.subr.bf16.mxu0 %v2004
    %2558 = vmatpush1.bf16.msra.mxu0 %v2003
    %2559 = vmatprep.subr.bf16.mxu0 %v2002
    %2560 = vmatpush1.bf16.msra.mxu0 %v2001
    %2561 = vmatprep.subr.bf16.mxu0 %v2000
    %2562 = vmatpush1.bf16.msra.mxu0 %v1999
    %2563 = vmatprep.subr.bf16.mxu0 %v2030
    %2564 = vmatpush2.bf16.msra.mxu0 %v2029
    %2565 = vmatprep.subr.bf16.mxu0 %v2028
    %2566 = vmatpush2.bf16.msra.mxu0 %v2027
    %2567 = vmatprep.subr.bf16.mxu0 %v2026
    %2568 = vmatpush2.bf16.msra.mxu0 %v2025
    %2569 = vmatprep.subr.bf16.mxu0 %v2024
    %2570 = vmatpush2.bf16.msra.mxu0 %v2023
    %2571 = vmatprep.subr.bf16.mxu0 %v2022
    %2572 = vmatpush2.bf16.msra.mxu0 %v2021
    %2573 = vmatprep.subr.bf16.mxu0 %v2020
    %2574 = vmatpush2.bf16.msra.mxu0 %v2019
    %2575 = vmatprep.subr.bf16.mxu0 %v2018
    %2576 = vmatpush2.bf16.msra.mxu0 %v2017
    %2577 = vmatprep.subr.bf16.mxu0 %v2016
    %2578 = vmatpush2.bf16.msra.mxu0 %v2015
    %2579 = vmatprep.mubr.bf16.mxu0 %v115
    %2580 = vmatmul.mubr.bf16.gmra.mxu0 %v114
    %v2581 = vpop.f32.mrf.mxu0
    %v2582 = vadd.f32 %v2541, %v2581
    %v2583 = vpop.f32.mrf.mxu0
    %v2584 = vadd.f32 %v2543, %v2583
    %v2585 = vpop.f32.mrf.mxu0
    %v2586 = vpop.f32.mrf.mxu0
    %2587 = vdwg.mxu0
    %2588 = vmatprep.subr.bf16.mxu0 %v2046
    %2589 = vmatpush1.bf16.msra.mxu0 %v2045
    %2590 = vmatprep.subr.bf16.mxu0 %v2044
    %2591 = vmatpush1.bf16.msra.mxu0 %v2043
    %2592 = vmatprep.subr.bf16.mxu0 %v2042
    %2593 = vmatpush1.bf16.msra.mxu0 %v2041
    %2594 = vmatprep.subr.bf16.mxu0 %v2040
    %2595 = vmatpush1.bf16.msra.mxu0 %v2039
    %2596 = vmatprep.subr.bf16.mxu0 %v2038
    %2597 = vmatpush1.bf16.msra.mxu0 %v2037
    %2598 = vmatprep.subr.bf16.mxu0 %v2036
    %2599 = vmatpush1.bf16.msra.mxu0 %v2035
    %2600 = vmatprep.subr.bf16.mxu0 %v2034
    %2601 = vmatpush1.bf16.msra.mxu0 %v2033
    %2602 = vmatprep.subr.bf16.mxu0 %v2032
    %2603 = vmatpush1.bf16.msra.mxu0 %v2031
    %2604 = vmatprep.subr.bf16.mxu0 %v2062
    %2605 = vmatpush2.bf16.msra.mxu0 %v2061
    %2606 = vmatprep.subr.bf16.mxu0 %v2060
    %2607 = vmatpush2.bf16.msra.mxu0 %v2059
    %2608 = vmatprep.subr.bf16.mxu0 %v2058
    %2609 = vmatpush2.bf16.msra.mxu0 %v2057
    %2610 = vmatprep.subr.bf16.mxu0 %v2056
    %2611 = vmatpush2.bf16.msra.mxu0 %v2055
    %2612 = vmatprep.subr.bf16.mxu0 %v2054
    %2613 = vmatpush2.bf16.msra.mxu0 %v2053
    %2614 = vmatprep.subr.bf16.mxu0 %v2052
    %2615 = vmatpush2.bf16.msra.mxu0 %v2051
    %2616 = vmatprep.subr.bf16.mxu0 %v2050
    %2617 = vmatpush2.bf16.msra.mxu0 %v2049
    %2618 = vmatprep.subr.bf16.mxu0 %v2048
    %2619 = vmatpush2.bf16.msra.mxu0 %v2047
    %2620 = vmatprep.mubr.bf16.mxu0 %v117
    %2621 = vmatmul.mubr.bf16.gmra.mxu0 %v116
    %v2622 = vpop.f32.mrf.mxu0
    %v2623 = vadd.f32 %v2582, %v2622
    %v2624 = vpop.f32.mrf.mxu0
    %v2625 = vadd.f32 %v2584, %v2624
    %v2626 = vpop.f32.mrf.mxu0
    %v2627 = vpop.f32.mrf.mxu0
    %2628 = vdwg.mxu0
    %2629 = vmatprep.subr.bf16.mxu0 %v2078
    %2630 = vmatpush1.bf16.msra.mxu0 %v2077
    %2631 = vmatprep.subr.bf16.mxu0 %v2076
    %2632 = vmatpush1.bf16.msra.mxu0 %v2075
    %2633 = vmatprep.subr.bf16.mxu0 %v2074
    %2634 = vmatpush1.bf16.msra.mxu0 %v2073
    %2635 = vmatprep.subr.bf16.mxu0 %v2072
    %2636 = vmatpush1.bf16.msra.mxu0 %v2071
    %2637 = vmatprep.subr.bf16.mxu0 %v2070
    %2638 = vmatpush1.bf16.msra.mxu0 %v2069
    %2639 = vmatprep.subr.bf16.mxu0 %v2068
    %2640 = vmatpush1.bf16.msra.mxu0 %v2067
    %2641 = vmatprep.subr.bf16.mxu0 %v2066
    %2642 = vmatpush1.bf16.msra.mxu0 %v2065
    %2643 = vmatprep.subr.bf16.mxu0 %v2064
    %2644 = vmatpush1.bf16.msra.mxu0 %v2063
    %2645 = vmatprep.subr.bf16.mxu0 %v2094
    %2646 = vmatpush2.bf16.msra.mxu0 %v2093
    %2647 = vmatprep.subr.bf16.mxu0 %v2092
    %2648 = vmatpush2.bf16.msra.mxu0 %v2091
    %2649 = vmatprep.subr.bf16.mxu0 %v2090
    %2650 = vmatpush2.bf16.msra.mxu0 %v2089
    %2651 = vmatprep.subr.bf16.mxu0 %v2088
    %2652 = vmatpush2.bf16.msra.mxu0 %v2087
    %2653 = vmatprep.subr.bf16.mxu0 %v2086
    %2654 = vmatpush2.bf16.msra.mxu0 %v2085
    %2655 = vmatprep.subr.bf16.mxu0 %v2084
    %2656 = vmatpush2.bf16.msra.mxu0 %v2083
    %2657 = vmatprep.subr.bf16.mxu0 %v2082
    %2658 = vmatpush2.bf16.msra.mxu0 %v2081
    %2659 = vmatprep.subr.bf16.mxu0 %v2080
    %2660 = vmatpush2.bf16.msra.mxu0 %v2079
    %2661 = vmatprep.mubr.bf16.mxu0 %v119
    %2662 = vmatmul.mubr.bf16.gmra.mxu0 %v118
    %v2663 = vpop.f32.mrf.mxu0
    %v2664 = vadd.f32 %v2623, %v2663
    %v2665 = vpop.f32.mrf.mxu0
    %v2666 = vadd.f32 %v2625, %v2665
    %v2667 = vpop.f32.mrf.mxu0
    %v2668 = vpop.f32.mrf.mxu0
    %2669 = vdwg.mxu0
    %2670 = vmatprep.subr.bf16.mxu0 %v2110
    %2671 = vmatpush1.bf16.msra.mxu0 %v2109
    %2672 = vmatprep.subr.bf16.mxu0 %v2108
    %2673 = vmatpush1.bf16.msra.mxu0 %v2107
    %2674 = vmatprep.subr.bf16.mxu0 %v2106
    %2675 = vmatpush1.bf16.msra.mxu0 %v2105
    %2676 = vmatprep.subr.bf16.mxu0 %v2104
    %2677 = vmatpush1.bf16.msra.mxu0 %v2103
    %2678 = vmatprep.subr.bf16.mxu0 %v2102
    %2679 = vmatpush1.bf16.msra.mxu0 %v2101
    %2680 = vmatprep.subr.bf16.mxu0 %v2100
    %2681 = vmatpush1.bf16.msra.mxu0 %v2099
    %2682 = vmatprep.subr.bf16.mxu0 %v2098
    %2683 = vmatpush1.bf16.msra.mxu0 %v2097
    %2684 = vmatprep.subr.bf16.mxu0 %v2096
    %2685 = vmatpush1.bf16.msra.mxu0 %v2095
    %2686 = vmatprep.subr.bf16.mxu0 %v2126
    %2687 = vmatpush2.bf16.msra.mxu0 %v2125
    %2688 = vmatprep.subr.bf16.mxu0 %v2124
    %2689 = vmatpush2.bf16.msra.mxu0 %v2123
    %2690 = vmatprep.subr.bf16.mxu0 %v2122
    %2691 = vmatpush2.bf16.msra.mxu0 %v2121
    %2692 = vmatprep.subr.bf16.mxu0 %v2120
    %2693 = vmatpush2.bf16.msra.mxu0 %v2119
    %2694 = vmatprep.subr.bf16.mxu0 %v2118
    %2695 = vmatpush2.bf16.msra.mxu0 %v2117
    %2696 = vmatprep.subr.bf16.mxu0 %v2116
    %2697 = vmatpush2.bf16.msra.mxu0 %v2115
    %2698 = vmatprep.subr.bf16.mxu0 %v2114
    %2699 = vmatpush2.bf16.msra.mxu0 %v2113
    %2700 = vmatprep.subr.bf16.mxu0 %v2112
    %2701 = vmatpush2.bf16.msra.mxu0 %v2111
    %2702 = vmatprep.mubr.bf16.mxu0 %v121
    %2703 = vmatmul.mubr.bf16.gmra.mxu0 %v120
    %v2704 = vpop.f32.mrf.mxu0
    %v2705 = vadd.f32 %v2664, %v2704
    %v2706 = vpop.f32.mrf.mxu0
    %v2707 = vadd.f32 %v2666, %v2706
    %v2708 = vpop.f32.mrf.mxu0
    %v2709 = vpop.f32.mrf.mxu0
    %2710 = vdwg.mxu0
    %2711 = vst [vmem:[#allocation11] sm:$0xff] %v2705
    %2712 = vst [vmem:[#allocation11 + $0x8] sm:$0xff] %v2707
    // Predicated region
    $region42: #{cross_modal_projector_pallas.1} parent=1 // pred_check
      _
    $region43: #{cross_modal_projector_pallas.1} parent=1 // pred_check_branch
      %2714 = sbr.rel (0) target = $region45
    $region44: #{cross_modal_projector_pallas.1} parent=1 // pred_region
      %s2716 = ssub.s32 256, 256
      %2717 = vsyncadd [#allocation4], %s2716
      %s2719 = sshll.u32 [#allocation10], 4
      %s2720 = int_to_ptr.vmem [resolvable:$true] %s2719
      %2722 = dma.vmem_to_hbm [thread:$0]  %s2720, 256, %s6, [#allocation4]
    $region45: #{cross_modal_projector_pallas.1} parent=1 // pred_fallthru
      _
    // Predicated region
    $region46: #{cross_modal_projector_pallas.1} parent=1 // pred_check
      _
    $region47: #{cross_modal_projector_pallas.1} parent=1 // pred_check_branch
      %2724 = sbr.rel (0) target = $region49
    $region48: #{cross_modal_projector_pallas.1} parent=1 // pred_region
      %s2726 = ssub.s32 256, 256
      %2727 = vsyncadd [#allocation12], %s2726
      %s2729 = sshll.u32 [#allocation11], 4
      %s2730 = int_to_ptr.vmem [resolvable:$true] %s2729
      %2732 = dma.vmem_to_hbm [thread:$0]  %s2730, 256, %s7, [#allocation12]
    $region49: #{cross_modal_projector_pallas.1} parent=1 // pred_fallthru
      _
    // Predicated region
    $region50: #{cross_modal_projector_pallas.1} parent=1 // pred_check
      _
    $region51: #{cross_modal_projector_pallas.1} parent=1 // pred_check_branch
      %2734 = sbr.rel (0) target = $region53
    $region52: #{cross_modal_projector_pallas.1} parent=1 // pred_region
      %2735 = dma.done [#allocation4], 256
    $region53: #{cross_modal_projector_pallas.1} parent=1 // pred_fallthru
      _
    // Predicated region
    $region54: #{cross_modal_projector_pallas.1} parent=1 // pred_check
      _
    $region55: #{cross_modal_projector_pallas.1} parent=1 // pred_check_branch
      %2737 = sbr.rel (0) target = $region57
    $region56: #{cross_modal_projector_pallas.1} parent=1 // pred_region
      %2738 = dma.done [#allocation12], 256
    $region57: #{cross_modal_projector_pallas.1} parent=1 // pred_fallthru
      _
    %2739 = vsyncpa [#allocation3], 1
    %2740 = vsyncpa [#allocation6], 1
    %2741 = vsyncpa [#allocation9], 1
    %2742 = vsyncpa [#allocation4], 1
    %2743 = vsyncpa [#allocation12], 1

</llo_original>
